<compile_context>
chip_gen: v6e
topology: v6e:2x2x1
jax: 0.10.0
libtpu: 0.0.40
codegen_flags: <defaults>
</compile_context>

<pallas_src>
import math

import jax
import jax.numpy as jnp
from jax.experimental import pallas as pl
from jax.experimental.pallas import tpu as pltpu


# ----------------------------- config (small) ------------------------------
BATCH = 2
SEQ = 16
D_MODEL = 128
NUM_HEADS = 8
HEAD_DIM = D_MODEL // NUM_HEADS
DFF = 256
LN_EPS = 1e-5


def _gelu_exact(x):
    # matches torch.nn.functional.gelu default (erf formulation)
    return 0.5 * x * (1.0 + jax.lax.erf(x / jnp.sqrt(2.0).astype(x.dtype)))


def _layer_norm(x, gamma, beta, eps):
    mean = jnp.mean(x, axis=-1, keepdims=True)
    var = jnp.mean((x - mean) ** 2, axis=-1, keepdims=True)
    inv = jax.lax.rsqrt(var + eps)
    return (x - mean) * inv * gamma + beta


def encoder_block_kernel(
    x_ref,               # (B*S, D) f32
    bias_ref,            # (B*S, B*S) f32  additive {0, -1e30}: key padding + cross-batch
    wqkv_ref, bqkv_ref,  # (D, 3D) bf16, (1, 3D) f32  (q part pre-scaled by 1/sqrt(Hd))
    wo_ref, bo_ref,      # (D, D) bf16, (1, D) f32
    ln1g_ref, ln1b_ref,  # (1, D) f32
    w1_ref, b1_ref,      # (D, DFF) bf16, (1, DFF) f32
    w2_ref, b2_ref,      # (DFF, D) bf16, (1, D) f32
    ln2g_ref, ln2b_ref,  # (1, D) f32
    o_ref,               # (B*S, D) f32
):
    f32 = jnp.float32
    bf16 = jnp.bfloat16
    BS = BATCH * SEQ

    x = x_ref[...]                                             # (BS, D) f32

    # ---- fused QKV projection (one bf16 MXU matmul, f32 accumulate) -------
    qkv = jnp.dot(x.astype(bf16), wqkv_ref[...],
                  preferred_element_type=f32) + bqkv_ref[...]  # (BS, 3D) f32

    # ---- head split: one 2-D transpose, then free non-minor reshapes ------
    # (BS, 3D) -> (3D, BS); rows are features c = h*Hd + d, so splitting the
    # leading (sublane) axis into (H, Hd) costs nothing.
    qkv_t = qkv.T                                              # (3D, BS) f32
    q = qkv_t[0 * D_MODEL:1 * D_MODEL].reshape(
        NUM_HEADS, HEAD_DIM, BS).astype(bf16)                  # (H, Hd, BS)
    k = qkv_t[1 * D_MODEL:2 * D_MODEL].reshape(
        NUM_HEADS, HEAD_DIM, BS).astype(bf16)
    v = qkv_t[2 * D_MODEL:3 * D_MODEL].reshape(
        NUM_HEADS, HEAD_DIM, BS).astype(bf16)

    # ---- attention over the whole (B*S) slab -------------------------------
    # s[h, i, j] = sum_d q[h, d, i] * k[h, d, j]   (i, j are b*S+s rows)
    s = jax.lax.dot_general(q, k, (((1,), (1,)), ((0,), (0,))),
                            preferred_element_type=f32)        # (H, BS, BS)
    # additive bias kills both padded keys and cross-batch pairs, broadcast
    # over the head axis (no per-head replication).
    s = s + bias_ref[...]
    m = jnp.max(s, axis=-1, keepdims=True)
    p = jnp.exp(s - m)
    p = p / jnp.sum(p, axis=-1, keepdims=True)                 # exact division
    # NOTE: a fully-masked key row is undefined (torch yields NaN); not hit here.

    # ctx_t[h, d, i] = sum_j v[h, d, j] * p[h, i, j]
    ctx_t = jax.lax.dot_general(v, p.astype(bf16),
                                (((2,), (2,)), ((0,), (0,))),
                                preferred_element_type=f32)    # (H, Hd, BS)
    # back to a lane-dense (BS, D) slab: free merge + one 2-D transpose.
    ctx = ctx_t.reshape(D_MODEL, BS).T                         # (BS, D) f32

    # ---- output projection: single lane-dense (BS,D) x (D,D) dot ----------
    attn = jnp.dot(ctx.astype(bf16), wo_ref[...],
                   preferred_element_type=f32) + bo_ref[...]

    # residual + layer norm 1  (dropout = identity in eval mode)
    h1 = _layer_norm(x + attn, ln1g_ref[...], ln1b_ref[...], LN_EPS)

    # ---- feed-forward ------------------------------------------------------
    ff = jnp.dot(h1.astype(bf16), w1_ref[...],
                 preferred_element_type=f32) + b1_ref[...]
    ff = _gelu_exact(ff)
    ff = jnp.dot(ff.astype(bf16), w2_ref[...],
                 preferred_element_type=f32) + b2_ref[...]

    # residual + layer norm 2
    out = _layer_norm(h1 + ff, ln2g_ref[...], ln2b_ref[...], LN_EPS)
    o_ref[...] = out.astype(o_ref.dtype)


def encoder_block(x, attention_mask, params):
    """x: (B, S, D) float32, attention_mask: (B, S) {0,1} float32."""
    B, S, D = x.shape
    BS = B * S
    (wq, bq, wk, bk, wv, bv, wo, bo,
     ln1g, ln1b, w1, b1, w2, b2, ln2g, ln2b) = params

    # --- host-side parameter packing (free, outside the kernel) ------------
    scale = 1.0 / math.sqrt(HEAD_DIM)                 # exact (1/4) in f32
    wqkv = jnp.concatenate([wq * scale, wk, wv], axis=1).astype(jnp.bfloat16)
    bqkv = jnp.concatenate([bq * scale, bk, bv], axis=1)       # (1, 3D) f32
    wo_b = wo.astype(jnp.bfloat16)
    w1_b = w1.astype(jnp.bfloat16)
    w2_b = w2.astype(jnp.bfloat16)

    # Combined additive bias (BS, BS): 0 where (same batch AND key unmasked),
    # -1e30 elsewhere.  Replaces the per-head-replicated (B*H,1,S) bias.
    row_batch = jnp.arange(BS, dtype=jnp.int32) // S
    same_batch = row_batch[:, None] == row_batch[None, :]
    key_ok = (attention_mask.reshape(BS) > 0)[None, :]
    bias = jnp.where(same_batch & key_ok, 0.0, -1e30).astype(jnp.float32)

    x2 = x.reshape(BS, D)

    inputs = (x2, bias, wqkv, bqkv, wo_b, bo,
              ln1g, ln1b, w1_b, b1, w2_b, b2, ln2g, ln2b)

    def full_spec(shape):
        nd = len(shape)
        return pl.BlockSpec(shape, lambda i, nd=nd: (0,) * nd)

    # Advisory cost estimate so XLA can schedule/overlap the custom call.
    flops = int(
        2 * BS * D * (3 * D)                        # fused QKV
        + 2 * (2 * NUM_HEADS * BS * BS * HEAD_DIM)  # scores + ctx
        + 2 * BS * D * D                            # output projection
        + 2 * (2 * BS * D * DFF)                    # FFN (two matmuls)
    )
    transcendentals = int(NUM_HEADS * BS * BS + BS * DFF + 4 * BS)
    bytes_accessed = int(sum(int(a.nbytes) for a in inputs) + BS * D * 4)
    cost = pl.CostEstimate(flops=flops, transcendentals=transcendentals,
                           bytes_accessed=bytes_accessed)

    out = pl.pallas_call(
        encoder_block_kernel,
        out_shape=jax.ShapeDtypeStruct((BS, D), x.dtype),
        grid_spec=pltpu.PrefetchScalarGridSpec(
            num_scalar_prefetch=0,
            grid=(1,),
            in_specs=[full_spec(a.shape) for a in inputs],
            out_specs=full_spec((BS, D)),
        ),
        compiler_params=pltpu.CompilerParams(
            dimension_semantics=("arbitrary",)),
        cost_estimate=cost,
    )(*inputs)
    return out.reshape(B, S, D)


# --------------------------- pure-JAX reference -----------------------------
def encoder_block_ref(x, mask, params):
    (wq, bq, wk, bk, wv, bv, wo, bo,
     ln1g, ln1b, w1, b1, w2, b2, ln2g, ln2b) = params
    B, S, D = x.shape
    q = x @ wq + bq[0]
    k = x @ wk + bk[0]
    v = x @ wv + bv[0]
    q = q.reshape(B, S, NUM_HEADS, HEAD_DIM).transpose(0, 2, 1, 3)
    k = k.reshape(B, S, NUM_HEADS, HEAD_DIM).transpose(0, 2, 1, 3)
    v = v.reshape(B, S, NUM_HEADS, HEAD_DIM).transpose(0, 2, 1, 3)
    scores = jnp.einsum("bhqd,bhkd->bhqk", q, k) / math.sqrt(HEAD_DIM)
    bias = jnp.where(mask > 0, 0.0, -1e30)[:, None, None, :]
    attn = jax.nn.softmax(scores + bias, axis=-1)
    out = jnp.einsum("bhqk,bhkd->bhqd", attn, v)
    out = out.transpose(0, 2, 1, 3).reshape(B, S, D)
    out = out @ wo + bo[0]

    def ln(z, g, b):
        m = z.mean(-1, keepdims=True)
        var = ((z - m) ** 2).mean(-1, keepdims=True)
        return (z - m) * jax.lax.rsqrt(var + LN_EPS) * g[0] + b[0]

    h1 = ln(x + out, ln1g, ln1b)
    ff = jax.nn.gelu(h1 @ w1 + b1[0], approximate=False)
    ff = ff @ w2 + b2[0]
    return ln(h1 + ff, ln2g, ln2b)


def init_params(key):
    ks = jax.random.split(key, 6)
    s = 0.02

    def lin(k, fan_in, fan_out):
        kw, kb = jax.random.split(k)
        w = jax.random.normal(kw, (fan_in, fan_out), jnp.float32) * s
        b = jax.random.normal(kb, (1, fan_out), jnp.float32) * s
        return w, b

    wq, bq = lin(ks[0], D_MODEL, D_MODEL)
    wk, bk = lin(ks[1], D_MODEL, D_MODEL)
    wv, bv = lin(ks[2], D_MODEL, D_MODEL)
    wo, bo = lin(ks[3], D_MODEL, D_MODEL)
    ln1g = jnp.ones((1, D_MODEL), jnp.float32)
    ln1b = jnp.zeros((1, D_MODEL), jnp.float32)
    w1, b1 = lin(ks[4], D_MODEL, DFF)
    w2, b2 = lin(ks[5], DFF, D_MODEL)
    ln2g = jnp.ones((1, D_MODEL), jnp.float32)
    ln2b = jnp.zeros((1, D_MODEL), jnp.float32)
    return (wq, bq, wk, bk, wv, bv, wo, bo,
            ln1g, ln1b, w1, b1, w2, b2, ln2g, ln2b)


if __name__ == "__main__":
    key = jax.random.PRNGKey(0)
    kx, kp = jax.random.split(key, 2)
    x = jax.random.normal(kx, (BATCH, SEQ, D_MODEL), jnp.float32)
    # attention mask: 1 = attend; mask out the last 3 keys of batch element 1
    mask = jnp.ones((BATCH, SEQ), jnp.float32)
    mask = mask.at[1, -3:].set(0.0)
    params = init_params(kp)

    out = encoder_block(x, mask, params)
    jax.block_until_ready(out)

    ref = encoder_block_ref(x, mask, params)
    assert out.shape == (BATCH, SEQ, D_MODEL)
    # tolerance reflects bf16 matmul operands (f32 accumulation); softmax,
    # layernorm and GELU run in f32 and use exact division.
    err = float(jnp.max(jnp.abs(out - ref)))
    assert jnp.allclose(out, ref, atol=1e-2, rtol=1e-2), err
    print("KERNEL_OK")
</pallas_src>

<mosaic_0001>
module attributes {stable_mosaic.version = 11 : i64} {
  func.func @encoder_block_kernel(%arg0: i32, %arg1: memref<32x128xf32, #tpu.memory_space<vmem>>, %arg2: memref<32x32xf32, #tpu.memory_space<vmem>>, %arg3: memref<128x384xbf16, #tpu.memory_space<vmem>>, %arg4: memref<1x384xf32, #tpu.memory_space<vmem>>, %arg5: memref<128x128xbf16, #tpu.memory_space<vmem>>, %arg6: memref<1x128xf32, #tpu.memory_space<vmem>>, %arg7: memref<1x128xf32, #tpu.memory_space<vmem>>, %arg8: memref<1x128xf32, #tpu.memory_space<vmem>>, %arg9: memref<128x256xbf16, #tpu.memory_space<vmem>>, %arg10: memref<1x256xf32, #tpu.memory_space<vmem>>, %arg11: memref<256x128xbf16, #tpu.memory_space<vmem>>, %arg12: memref<1x128xf32, #tpu.memory_space<vmem>>, %arg13: memref<1x128xf32, #tpu.memory_space<vmem>>, %arg14: memref<1x128xf32, #tpu.memory_space<vmem>>, %arg15: memref<32x128xf32, #tpu.memory_space<vmem>>) attributes {dimension_semantics = [#tpu.dimension_semantics<arbitrary>], iteration_bounds = array<i64: 1>, scalar_prefetch = 0 : i64, scratch_operands = 0 : i64, tpu.core_type = #tpu.core_type<tc>, window_params = [{pipeline_mode = #tpu.pipeline_mode<synchronous>, transform_indices = @transform_0, window_bounds = array<i64: 32, 128>}, {pipeline_mode = #tpu.pipeline_mode<synchronous>, transform_indices = @transform_1, window_bounds = array<i64: 32, 32>}, {pipeline_mode = #tpu.pipeline_mode<synchronous>, transform_indices = @transform_2, window_bounds = array<i64: 128, 384>}, {pipeline_mode = #tpu.pipeline_mode<synchronous>, transform_indices = @transform_3, window_bounds = array<i64: 1, 384>}, {pipeline_mode = #tpu.pipeline_mode<synchronous>, transform_indices = @transform_4, window_bounds = array<i64: 128, 128>}, {pipeline_mode = #tpu.pipeline_mode<synchronous>, transform_indices = @transform_5, window_bounds = array<i64: 1, 128>}, {pipeline_mode = #tpu.pipeline_mode<synchronous>, transform_indices = @transform_6, window_bounds = array<i64: 1, 128>}, {pipeline_mode = #tpu.pipeline_mode<synchronous>, transform_indices = @transform_7, window_bounds = array<i64: 1, 128>}, {pipeline_mode = #tpu.pipeline_mode<synchronous>, transform_indices = @transform_8, window_bounds = array<i64: 128, 256>}, {pipeline_mode = #tpu.pipeline_mode<synchronous>, transform_indices = @transform_9, window_bounds = array<i64: 1, 256>}, {pipeline_mode = #tpu.pipeline_mode<synchronous>, transform_indices = @transform_10, window_bounds = array<i64: 256, 128>}, {pipeline_mode = #tpu.pipeline_mode<synchronous>, transform_indices = @transform_11, window_bounds = array<i64: 1, 128>}, {pipeline_mode = #tpu.pipeline_mode<synchronous>, transform_indices = @transform_12, window_bounds = array<i64: 1, 128>}, {pipeline_mode = #tpu.pipeline_mode<synchronous>, transform_indices = @transform_13, window_bounds = array<i64: 1, 128>}, {pipeline_mode = #tpu.pipeline_mode<synchronous>, transform_indices = @transform_14, window_bounds = array<i64: 32, 128>}]} {
    %c0 = arith.constant 0 : index
    %c0_0 = arith.constant 0 : index
    %0 = vector.load %arg1[%c0, %c0_0] : memref<32x128xf32, #tpu.memory_space<vmem>>, vector<32x128xf32>
    %1 = arith.truncf %0 : vector<32x128xf32> to vector<32x128xbf16>
    %c0_1 = arith.constant 0 : index
    %c0_2 = arith.constant 0 : index
    %2 = vector.load %arg3[%c0_1, %c0_2] : memref<128x384xbf16, #tpu.memory_space<vmem>>, vector<128x384xbf16>
    %cst = arith.constant dense<0.000000e+00> : vector<32x384xf32>
    %3 = tpu.matmul %1, %2, %cst {dimension_numbers = #tpu.dot_dimension_numbers<[1], [0], [0], [1], [0, 0, 1, 1], [], []>} : vector<32x128xbf16>, vector<128x384xbf16>, vector<32x384xf32> -> vector<32x384xf32>
    %c0_3 = arith.constant 0 : index
    %c0_4 = arith.constant 0 : index
    %4 = vector.load %arg4[%c0_3, %c0_4] : memref<1x384xf32, #tpu.memory_space<vmem>>, vector<1x384xf32>
    %5 = vector.broadcast %4 : vector<1x384xf32> to vector<32x384xf32>
    %6 = arith.addf %3, %5 : vector<32x384xf32>
    %7 = tpu.transpose %6, [1, 0] : vector<32x384xf32> -> vector<384x32xf32>
    %8 = vector.extract_strided_slice %7 {offsets = [0, 0], sizes = [128, 32], strides = [1, 1]} : vector<384x32xf32> to vector<128x32xf32>
    %9 = vector.shape_cast %8 : vector<128x32xf32> to vector<8x16x32xf32>
    %10 = arith.truncf %9 : vector<8x16x32xf32> to vector<8x16x32xbf16>
    %11 = vector.extract_strided_slice %7 {offsets = [128, 0], sizes = [128, 32], strides = [1, 1]} : vector<384x32xf32> to vector<128x32xf32>
    %12 = vector.shape_cast %11 : vector<128x32xf32> to vector<8x16x32xf32>
    %13 = arith.truncf %12 : vector<8x16x32xf32> to vector<8x16x32xbf16>
    %14 = vector.extract_strided_slice %7 {offsets = [256, 0], sizes = [128, 32], strides = [1, 1]} : vector<384x32xf32> to vector<128x32xf32>
    %15 = vector.shape_cast %14 : vector<128x32xf32> to vector<8x16x32xf32>
    %16 = arith.truncf %15 : vector<8x16x32xf32> to vector<8x16x32xbf16>
    %cst_5 = arith.constant dense<0.000000e+00> : vector<8x32x32xf32>
    %17 = tpu.matmul %10, %13, %cst_5 {dimension_numbers = #tpu.dot_dimension_numbers<[1], [1], [2], [2], [0, 0, 0, 2, 1, 2], [0], [0]>} : vector<8x16x32xbf16>, vector<8x16x32xbf16>, vector<8x32x32xf32> -> vector<8x32x32xf32>
    %c0_6 = arith.constant 0 : index
    %c0_7 = arith.constant 0 : index
    %18 = vector.load %arg2[%c0_6, %c0_7] : memref<32x32xf32, #tpu.memory_space<vmem>>, vector<32x32xf32>
    %19 = vector.shape_cast %18 : vector<32x32xf32> to vector<1x32x32xf32>
    %20 = vector.broadcast %19 : vector<1x32x32xf32> to vector<8x32x32xf32>
    %21 = arith.addf %17, %20 : vector<8x32x32xf32>
    %cst_8 = arith.constant dense<0xFF800000> : vector<8x32xf32>
    %22 = vector.multi_reduction <maximumf>, %21, %cst_8 [2] : vector<8x32x32xf32> to vector<8x32xf32>
    %23 = vector.shape_cast %22 : vector<8x32xf32> to vector<8x32x1xf32>
    %24 = vector.broadcast %23 : vector<8x32x1xf32> to vector<8x32x32xf32>
    %25 = arith.subf %21, %24 : vector<8x32x32xf32>
    %26 = math.exp %25 : vector<8x32x32xf32>
    %cst_9 = arith.constant dense<0.000000e+00> : vector<8x32xf32>
    %27 = vector.multi_reduction <add>, %26, %cst_9 [2] : vector<8x32x32xf32> to vector<8x32xf32>
    %28 = vector.shape_cast %27 : vector<8x32xf32> to vector<8x32x1xf32>
    %29 = vector.broadcast %28 : vector<8x32x1xf32> to vector<8x32x32xf32>
    %30 = arith.divf %26, %29 : vector<8x32x32xf32>
    %31 = arith.truncf %30 : vector<8x32x32xf32> to vector<8x32x32xbf16>
    %cst_10 = arith.constant dense<0.000000e+00> : vector<8x16x32xf32>
    %32 = tpu.matmul %16, %31, %cst_10 {dimension_numbers = #tpu.dot_dimension_numbers<[2], [2], [1], [1], [0, 0, 0, 1, 1, 1], [0], [0]>} : vector<8x16x32xbf16>, vector<8x32x32xbf16>, vector<8x16x32xf32> -> vector<8x16x32xf32>
    %33 = vector.shape_cast %32 : vector<8x16x32xf32> to vector<128x32xf32>
    %34 = tpu.transpose %33, [1, 0] : vector<128x32xf32> -> vector<32x128xf32>
    %35 = arith.truncf %34 : vector<32x128xf32> to vector<32x128xbf16>
    %c0_11 = arith.constant 0 : index
    %c0_12 = arith.constant 0 : index
    %36 = vector.load %arg5[%c0_11, %c0_12] : memref<128x128xbf16, #tpu.memory_space<vmem>>, vector<128x128xbf16>
    %cst_13 = arith.constant dense<0.000000e+00> : vector<32x128xf32>
    %37 = tpu.matmul %35, %36, %cst_13 {dimension_numbers = #tpu.dot_dimension_numbers<[1], [0], [0], [1], [0, 0, 1, 1], [], []>} : vector<32x128xbf16>, vector<128x128xbf16>, vector<32x128xf32> -> vector<32x128xf32>
    %c0_14 = arith.constant 0 : index
    %c0_15 = arith.constant 0 : index
    %38 = vector.load %arg6[%c0_14, %c0_15] : memref<1x128xf32, #tpu.memory_space<vmem>>, vector<1x128xf32>
    %39 = vector.broadcast %38 : vector<1x128xf32> to vector<32x128xf32>
    %40 = arith.addf %37, %39 : vector<32x128xf32>
    %41 = arith.addf %0, %40 : vector<32x128xf32>
    %c0_16 = arith.constant 0 : index
    %c0_17 = arith.constant 0 : index
    %42 = vector.load %arg7[%c0_16, %c0_17] : memref<1x128xf32, #tpu.memory_space<vmem>>, vector<1x128xf32>
    %c0_18 = arith.constant 0 : index
    %c0_19 = arith.constant 0 : index
    %43 = vector.load %arg8[%c0_18, %c0_19] : memref<1x128xf32, #tpu.memory_space<vmem>>, vector<1x128xf32>
    %cst_20 = arith.constant dense<0.000000e+00> : vector<32xf32>
    %44 = vector.multi_reduction <add>, %41, %cst_20 [1] : vector<32x128xf32> to vector<32xf32>
    %45 = vector.shape_cast %44 : vector<32xf32> to vector<32x1xf32>
    %cst_21 = arith.constant 1.280000e+02 : f32
    %46 = vector.broadcast %cst_21 : f32 to vector<32x1xf32>
    %47 = arith.divf %45, %46 : vector<32x1xf32>
    %48 = vector.broadcast %47 : vector<32x1xf32> to vector<32x128xf32>
    %49 = arith.subf %41, %48 : vector<32x128xf32>
    %50 = arith.mulf %49, %49 : vector<32x128xf32>
    %cst_22 = arith.constant dense<0.000000e+00> : vector<32xf32>
    %51 = vector.multi_reduction <add>, %50, %cst_22 [1] : vector<32x128xf32> to vector<32xf32>
    %52 = vector.shape_cast %51 : vector<32xf32> to vector<32x1xf32>
    %cst_23 = arith.constant 1.280000e+02 : f32
    %53 = vector.broadcast %cst_23 : f32 to vector<32x1xf32>
    %54 = arith.divf %52, %53 : vector<32x1xf32>
    %cst_24 = arith.constant 9.99999974E-6 : f32
    %55 = vector.broadcast %cst_24 : f32 to vector<32x1xf32>
    %56 = arith.addf %54, %55 : vector<32x1xf32>
    %57 = math.rsqrt %56 : vector<32x1xf32>
    %58 = vector.broadcast %47 : vector<32x1xf32> to vector<32x128xf32>
    %59 = arith.subf %41, %58 : vector<32x128xf32>
    %60 = vector.broadcast %57 : vector<32x1xf32> to vector<32x128xf32>
    %61 = arith.mulf %59, %60 : vector<32x128xf32>
    %62 = vector.broadcast %42 : vector<1x128xf32> to vector<32x128xf32>
    %63 = arith.mulf %61, %62 : vector<32x128xf32>
    %64 = vector.broadcast %43 : vector<1x128xf32> to vector<32x128xf32>
    %65 = arith.addf %63, %64 : vector<32x128xf32>
    %66 = arith.truncf %65 : vector<32x128xf32> to vector<32x128xbf16>
    %c0_25 = arith.constant 0 : index
    %c0_26 = arith.constant 0 : index
    %67 = vector.load %arg9[%c0_25, %c0_26] : memref<128x256xbf16, #tpu.memory_space<vmem>>, vector<128x256xbf16>
    %cst_27 = arith.constant dense<0.000000e+00> : vector<32x256xf32>
    %68 = tpu.matmul %66, %67, %cst_27 {dimension_numbers = #tpu.dot_dimension_numbers<[1], [0], [0], [1], [0, 0, 1, 1], [], []>} : vector<32x128xbf16>, vector<128x256xbf16>, vector<32x256xf32> -> vector<32x256xf32>
    %c0_28 = arith.constant 0 : index
    %c0_29 = arith.constant 0 : index
    %69 = vector.load %arg10[%c0_28, %c0_29] : memref<1x256xf32, #tpu.memory_space<vmem>>, vector<1x256xf32>
    %70 = vector.broadcast %69 : vector<1x256xf32> to vector<32x256xf32>
    %71 = arith.addf %68, %70 : vector<32x256xf32>
    %cst_30 = arith.constant 5.000000e-01 : f32
    %72 = vector.broadcast %cst_30 : f32 to vector<32x256xf32>
    %73 = arith.mulf %72, %71 : vector<32x256xf32>
    %cst_31 = arith.constant 2.000000e+00 : f32
    %74 = math.sqrt %cst_31 : f32
    %75 = vector.broadcast %74 : f32 to vector<32x256xf32>
    %76 = arith.divf %71, %75 : vector<32x256xf32>
    %77 = math.erf %76 : vector<32x256xf32>
    %cst_32 = arith.constant 1.000000e+00 : f32
    %78 = vector.broadcast %cst_32 : f32 to vector<32x256xf32>
    %79 = arith.addf %78, %77 : vector<32x256xf32>
    %80 = arith.mulf %73, %79 : vector<32x256xf32>
    %81 = arith.truncf %80 : vector<32x256xf32> to vector<32x256xbf16>
    %c0_33 = arith.constant 0 : index
    %c0_34 = arith.constant 0 : index
    %82 = vector.load %arg11[%c0_33, %c0_34] : memref<256x128xbf16, #tpu.memory_space<vmem>>, vector<256x128xbf16>
    %cst_35 = arith.constant dense<0.000000e+00> : vector<32x128xf32>
    %83 = tpu.matmul %81, %82, %cst_35 {dimension_numbers = #tpu.dot_dimension_numbers<[1], [0], [0], [1], [0, 0, 1, 1], [], []>} : vector<32x256xbf16>, vector<256x128xbf16>, vector<32x128xf32> -> vector<32x128xf32>
    %c0_36 = arith.constant 0 : index
    %c0_37 = arith.constant 0 : index
    %84 = vector.load %arg12[%c0_36, %c0_37] : memref<1x128xf32, #tpu.memory_space<vmem>>, vector<1x128xf32>
    %85 = vector.broadcast %84 : vector<1x128xf32> to vector<32x128xf32>
    %86 = arith.addf %83, %85 : vector<32x128xf32>
    %87 = arith.addf %65, %86 : vector<32x128xf32>
    %c0_38 = arith.constant 0 : index
    %c0_39 = arith.constant 0 : index
    %88 = vector.load %arg13[%c0_38, %c0_39] : memref<1x128xf32, #tpu.memory_space<vmem>>, vector<1x128xf32>
    %c0_40 = arith.constant 0 : index
    %c0_41 = arith.constant 0 : index
    %89 = vector.load %arg14[%c0_40, %c0_41] : memref<1x128xf32, #tpu.memory_space<vmem>>, vector<1x128xf32>
    %cst_42 = arith.constant dense<0.000000e+00> : vector<32xf32>
    %90 = vector.multi_reduction <add>, %87, %cst_42 [1] : vector<32x128xf32> to vector<32xf32>
    %91 = vector.shape_cast %90 : vector<32xf32> to vector<32x1xf32>
    %cst_43 = arith.constant 1.280000e+02 : f32
    %92 = vector.broadcast %cst_43 : f32 to vector<32x1xf32>
    %93 = arith.divf %91, %92 : vector<32x1xf32>
    %94 = vector.broadcast %93 : vector<32x1xf32> to vector<32x128xf32>
    %95 = arith.subf %87, %94 : vector<32x128xf32>
    %96 = arith.mulf %95, %95 : vector<32x128xf32>
    %cst_44 = arith.constant dense<0.000000e+00> : vector<32xf32>
    %97 = vector.multi_reduction <add>, %96, %cst_44 [1] : vector<32x128xf32> to vector<32xf32>
    %98 = vector.shape_cast %97 : vector<32xf32> to vector<32x1xf32>
    %cst_45 = arith.constant 1.280000e+02 : f32
    %99 = vector.broadcast %cst_45 : f32 to vector<32x1xf32>
    %100 = arith.divf %98, %99 : vector<32x1xf32>
    %cst_46 = arith.constant 9.99999974E-6 : f32
    %101 = vector.broadcast %cst_46 : f32 to vector<32x1xf32>
    %102 = arith.addf %100, %101 : vector<32x1xf32>
    %103 = math.rsqrt %102 : vector<32x1xf32>
    %104 = vector.broadcast %93 : vector<32x1xf32> to vector<32x128xf32>
    %105 = arith.subf %87, %104 : vector<32x128xf32>
    %106 = vector.broadcast %103 : vector<32x1xf32> to vector<32x128xf32>
    %107 = arith.mulf %105, %106 : vector<32x128xf32>
    %108 = vector.broadcast %88 : vector<1x128xf32> to vector<32x128xf32>
    %109 = arith.mulf %107, %108 : vector<32x128xf32>
    %110 = vector.broadcast %89 : vector<1x128xf32> to vector<32x128xf32>
    %111 = arith.addf %109, %110 : vector<32x128xf32>
    %c0_47 = arith.constant 0 : index
    %c0_48 = arith.constant 0 : index
    %112 = vector.load %arg15[%c0_47, %c0_48] : memref<32x128xf32, #tpu.memory_space<vmem>>, vector<32x128xf32>
    tpu.vector_store %arg15[%c0_47, %c0_48], %111 {strides = array<i32>} : memref<32x128xf32, #tpu.memory_space<vmem>>, vector<32x128xf32>,
    return
  }
  func.func @transform_0(%arg0: i32) -> (i32, i32) {
    %c0_i32 = arith.constant 0 : i32
    %c0_i32_0 = arith.constant 0 : i32
    %c0_i32_1 = arith.constant 0 : i32
    return %c0_i32, %c0_i32_0 : i32, i32
  }
  func.func @transform_1(%arg0: i32) -> (i32, i32) {
    %c0_i32 = arith.constant 0 : i32
    %c0_i32_0 = arith.constant 0 : i32
    %c0_i32_1 = arith.constant 0 : i32
    return %c0_i32, %c0_i32_0 : i32, i32
  }
  func.func @transform_2(%arg0: i32) -> (i32, i32) {
    %c0_i32 = arith.constant 0 : i32
    %c0_i32_0 = arith.constant 0 : i32
    %c0_i32_1 = arith.constant 0 : i32
    return %c0_i32, %c0_i32_0 : i32, i32
  }
  func.func @transform_3(%arg0: i32) -> (i32, i32) {
    %c0_i32 = arith.constant 0 : i32
    %c0_i32_0 = arith.constant 0 : i32
    %c0_i32_1 = arith.constant 0 : i32
    return %c0_i32, %c0_i32_0 : i32, i32
  }
  func.func @transform_4(%arg0: i32) -> (i32, i32) {
    %c0_i32 = arith.constant 0 : i32
    %c0_i32_0 = arith.constant 0 : i32
    %c0_i32_1 = arith.constant 0 : i32
    return %c0_i32, %c0_i32_0 : i32, i32
  }
  func.func @transform_5(%arg0: i32) -> (i32, i32) {
    %c0_i32 = arith.constant 0 : i32
    %c0_i32_0 = arith.constant 0 : i32
    %c0_i32_1 = arith.constant 0 : i32
    return %c0_i32, %c0_i32_0 : i32, i32
  }
  func.func @transform_6(%arg0: i32) -> (i32, i32) {
    %c0_i32 = arith.constant 0 : i32
    %c0_i32_0 = arith.constant 0 : i32
    %c0_i32_1 = arith.constant 0 : i32
    return %c0_i32, %c0_i32_0 : i32, i32
  }
  func.func @transform_7(%arg0: i32) -> (i32, i32) {
    %c0_i32 = arith.constant 0 : i32
    %c0_i32_0 = arith.constant 0 : i32
    %c0_i32_1 = arith.constant 0 : i32
    return %c0_i32, %c0_i32_0 : i32, i32
  }
  func.func @transform_8(%arg0: i32) -> (i32, i32) {
    %c0_i32 = arith.constant 0 : i32
    %c0_i32_0 = arith.constant 0 : i32
    %c0_i32_1 = arith.constant 0 : i32
    return %c0_i32, %c0_i32_0 : i32, i32
  }
  func.func @transform_9(%arg0: i32) -> (i32, i32) {
    %c0_i32 = arith.constant 0 : i32
    %c0_i32_0 = arith.constant 0 : i32
    %c0_i32_1 = arith.constant 0 : i32
    return %c0_i32, %c0_i32_0 : i32, i32
  }
  func.func @transform_10(%arg0: i32) -> (i32, i32) {
    %c0_i32 = arith.constant 0 : i32
    %c0_i32_0 = arith.constant 0 : i32
    %c0_i32_1 = arith.constant 0 : i32
    return %c0_i32, %c0_i32_0 : i32, i32
  }
  func.func @transform_11(%arg0: i32) -> (i32, i32) {
    %c0_i32 = arith.constant 0 : i32
    %c0_i32_0 = arith.constant 0 : i32
    %c0_i32_1 = arith.constant 0 : i32
    return %c0_i32, %c0_i32_0 : i32, i32
  }
  func.func @transform_12(%arg0: i32) -> (i32, i32) {
    %c0_i32 = arith.constant 0 : i32
    %c0_i32_0 = arith.constant 0 : i32
    %c0_i32_1 = arith.constant 0 : i32
    return %c0_i32, %c0_i32_0 : i32, i32
  }
  func.func @transform_13(%arg0: i32) -> (i32, i32) {
    %c0_i32 = arith.constant 0 : i32
    %c0_i32_0 = arith.constant 0 : i32
    %c0_i32_1 = arith.constant 0 : i32
    return %c0_i32, %c0_i32_0 : i32, i32
  }
  func.func @transform_14(%arg0: i32) -> (i32, i32) {
    %c0_i32 = arith.constant 0 : i32
    %c0_i32_0 = arith.constant 0 : i32
    %c0_i32_1 = arith.constant 0 : i32
    return %c0_i32, %c0_i32_0 : i32, i32
  }
}

</mosaic_0001>

<llo_original>
// kernel: tpu_custom_call.1
$region0: #{tpu_custom_call.1}
  #allocation0 [shape = 'u32[]', space=smem, size = 0x4, offset = 0x4, fixed_abs, tag = 'smem constant byte address 0x4 - core index']
  #allocation1 [shape = 'u32[144,128]{1,0:T(1,128)}', space=vmem, size = 0x12000, scoped, tag = 'internal scratch']
  %s0 = inlined_call_operand.hbm [shape: f32[32,128], index: 0, kind: input, shape index: {}]
  %s1 = inlined_call_operand.hbm [shape: f32[32,32], index: 1, kind: input, shape index: {}]
  %s2 = inlined_call_operand.hbm [shape: bf16[128,384], index: 2, kind: input, shape index: {}]
  %s3 = inlined_call_operand.vmem [shape: f32[1,384], index: 3, kind: input, shape index: {}]
  %s4 = inlined_call_operand.hbm [shape: bf16[128,128], index: 4, kind: input, shape index: {}]
  %s5 = inlined_call_operand.vmem [shape: f32[1,128], index: 5, kind: input, shape index: {}]
  %s6 = inlined_call_operand.vmem [shape: f32[1,128], index: 6, kind: input, shape index: {}]
  %s7 = inlined_call_operand.vmem [shape: f32[1,128], index: 7, kind: input, shape index: {}]
  %s8 = inlined_call_operand.hbm [shape: bf16[128,256], index: 8, kind: input, shape index: {}]
  %s9 = inlined_call_operand.vmem [shape: f32[1,256], index: 9, kind: input, shape index: {}]
  %s10 = inlined_call_operand.hbm [shape: bf16[256,128], index: 10, kind: input, shape index: {}]
  %s11 = inlined_call_operand.vmem [shape: f32[1,128], index: 11, kind: input, shape index: {}]
  %s12 = inlined_call_operand.vmem [shape: f32[1,128], index: 12, kind: input, shape index: {}]
  %s13 = inlined_call_operand.vmem [shape: f32[1,128], index: 13, kind: input, shape index: {}]
  %s14 = inlined_call_operand.hbm [shape: f32[32,128], index: 14, kind: output, shape index: {}]
  %s15 = sld [smem:[#allocation0]]
  $region90: #{tpu_custom_call.1} parent=0
    _
  %s17 = ssub.s32 1, %s15
  %s18 = scalar_select 0, %s17, %s15
  $region1: #{tpu_custom_call.1} parent=0
    #allocation2 [shape = 'u8[16384]{0}', space=vmem, size = 0x4000, scoped, tag = 'input window, operand 0, single buffered']
    #allocation3 [shape = 's32[1]{0}', space=sflag, size = 0x4, scoped, tag = 'scoped memory for tpu_custom_call.1']
    #allocation4 [shape = 's32[1]{0}', space=sflag, size = 0x4, scoped, tag = 'scoped memory for tpu_custom_call.1']
    #allocation5 [shape = 'u8[16384]{0}', space=vmem, size = 0x4000, scoped, tag = 'input window, operand 1, single buffered']
    #allocation6 [shape = 's32[1]{0}', space=sflag, size = 0x4, scoped, tag = 'scoped memory for tpu_custom_call.1']
    #allocation7 [shape = 'u8[98304]{0}', space=vmem, size = 0x18000, scoped, tag = 'input window, operand 2, single buffered']
    #allocation8 [shape = 'u8[32768]{0}', space=vmem, size = 0x8000, scoped, tag = 'input window, operand 4, single buffered']
    #allocation9 [shape = 's32[1]{0}', space=sflag, size = 0x4, scoped, tag = 'scoped memory for tpu_custom_call.1']
    #allocation10 [shape = 'u8[65536]{0}', space=vmem, size = 0x10000, scoped, tag = 'input window, operand 8, single buffered']
    #allocation11 [shape = 'u8[65536]{0}', space=vmem, size = 0x10000, scoped, tag = 'input window, operand 10, single buffered']
    #allocation12 [shape = 's32[1]{0}', space=sflag, size = 0x4, scoped, tag = 'scoped memory for tpu_custom_call.1']
    #allocation13 [shape = 'u8[16384]{0}', space=vmem, size = 0x4000, scoped, tag = 'output window, operand 0, single buffered']
    %19 = vsyncpa [#allocation3], 0
    %20 = vsyncpa [#allocation6], 0
    %21 = vsyncpa [#allocation9], 0
    %22 = vsyncpa [#allocation12], 0
    %23 = vsyncpa [#allocation4], 0
    // Predicated region
    $region2: #{tpu_custom_call.1} parent=1 // pred_check
      _
    $region3: #{tpu_custom_call.1} parent=1 // pred_check_branch
      %25 = sbr.rel (0) target = $region5
    $region4: #{tpu_custom_call.1} parent=1 // pred_region
      %s27 = ssub.s32 512, 512
      %28 = vsyncadd [#allocation3], %s27
      %s29 = sshll.u32 [#allocation2], 4
      %s30 = int_to_ptr.vmem [resolvable:$true] %s29
      %35 = dma.hbm_to_vmem [thread:$0]  %s0, 512, %s30, [#allocation3], 128, 128, 8
    $region5: #{tpu_custom_call.1} parent=1 // pred_fallthru
      _
    // Predicated region
    $region6: #{tpu_custom_call.1} parent=1 // pred_check
      _
    $region7: #{tpu_custom_call.1} parent=1 // pred_check_branch
      %37 = sbr.rel (0) target = $region9
    $region8: #{tpu_custom_call.1} parent=1 // pred_region
      %s39 = ssub.s32 512, 512
      %40 = vsyncadd [#allocation6], %s39
      %s41 = sshll.u32 [#allocation5], 4
      %s42 = int_to_ptr.vmem [resolvable:$true] %s41
      %47 = dma.hbm_to_vmem [thread:$0]  %s1, 512, %s42, [#allocation6], 128, 128, 8
    $region9: #{tpu_custom_call.1} parent=1 // pred_fallthru
      _
    // Predicated region
    $region10: #{tpu_custom_call.1} parent=1 // pred_check
      _
    $region11: #{tpu_custom_call.1} parent=1 // pred_check_branch
      %49 = sbr.rel (0) target = $region13
    $region12: #{tpu_custom_call.1} parent=1 // pred_region
      %s51 = ssub.s32 3072, 3072
      %52 = vsyncadd [#allocation6], %s51
      %s53 = sshll.u32 [#allocation7], 4
      %s54 = int_to_ptr.vmem [resolvable:$true] %s53
      %59 = dma.hbm_to_vmem [thread:$0]  %s2, 3072, %s54, [#allocation6], 192, 192, 12
    $region13: #{tpu_custom_call.1} parent=1 // pred_fallthru
      _
    // Predicated region
    $region14: #{tpu_custom_call.1} parent=1 // pred_check
      _
    $region15: #{tpu_custom_call.1} parent=1 // pred_check_branch
      %61 = sbr.rel (0) target = $region17
    $region16: #{tpu_custom_call.1} parent=1 // pred_region
      _
    $region17: #{tpu_custom_call.1} parent=1 // pred_fallthru
      _
    // Predicated region
    $region18: #{tpu_custom_call.1} parent=1 // pred_check
      _
    $region19: #{tpu_custom_call.1} parent=1 // pred_check_branch
      %63 = sbr.rel (0) target = $region21
    $region20: #{tpu_custom_call.1} parent=1 // pred_region
      %s65 = ssub.s32 1024, 1024
      %66 = vsyncadd [#allocation9], %s65
      %s67 = sshll.u32 [#allocation8], 4
      %s68 = int_to_ptr.vmem [resolvable:$true] %s67
      %73 = dma.hbm_to_vmem [thread:$0]  %s4, 1024, %s68, [#allocation9], 64, 64, 4
    $region21: #{tpu_custom_call.1} parent=1 // pred_fallthru
      _
    // Predicated region
    $region22: #{tpu_custom_call.1} parent=1 // pred_check
      _
    $region23: #{tpu_custom_call.1} parent=1 // pred_check_branch
      %75 = sbr.rel (0) target = $region25
    $region24: #{tpu_custom_call.1} parent=1 // pred_region
      _
    $region25: #{tpu_custom_call.1} parent=1 // pred_fallthru
      _
    // Predicated region
    $region26: #{tpu_custom_call.1} parent=1 // pred_check
      _
    $region27: #{tpu_custom_call.1} parent=1 // pred_check_branch
      %77 = sbr.rel (0) target = $region29
    $region28: #{tpu_custom_call.1} parent=1 // pred_region
      _
    $region29: #{tpu_custom_call.1} parent=1 // pred_fallthru
      _
    // Predicated region
    $region30: #{tpu_custom_call.1} parent=1 // pred_check
      _
    $region31: #{tpu_custom_call.1} parent=1 // pred_check_branch
      %79 = sbr.rel (0) target = $region33
    $region32: #{tpu_custom_call.1} parent=1 // pred_region
      _
    $region33: #{tpu_custom_call.1} parent=1 // pred_fallthru
      _
    // Predicated region
    $region34: #{tpu_custom_call.1} parent=1 // pred_check
      _
    $region35: #{tpu_custom_call.1} parent=1 // pred_check_branch
      %81 = sbr.rel (0) target = $region37
    $region36: #{tpu_custom_call.1} parent=1 // pred_region
      %s83 = ssub.s32 2048, 2048
      %84 = vsyncadd [#allocation9], %s83
      %s85 = sshll.u32 [#allocation10], 4
      %s86 = int_to_ptr.vmem [resolvable:$true] %s85
      %91 = dma.hbm_to_vmem [thread:$0]  %s8, 2048, %s86, [#allocation9], 128, 128, 8
    $region37: #{tpu_custom_call.1} parent=1 // pred_fallthru
      _
    // Predicated region
    $region38: #{tpu_custom_call.1} parent=1 // pred_check
      _
    $region39: #{tpu_custom_call.1} parent=1 // pred_check_branch
      %93 = sbr.rel (0) target = $region41
    $region40: #{tpu_custom_call.1} parent=1 // pred_region
      _
    $region41: #{tpu_custom_call.1} parent=1 // pred_fallthru
      _
    // Predicated region
    $region42: #{tpu_custom_call.1} parent=1 // pred_check
      _
    $region43: #{tpu_custom_call.1} parent=1 // pred_check_branch
      %95 = sbr.rel (0) target = $region45
    $region44: #{tpu_custom_call.1} parent=1 // pred_region
      %s97 = ssub.s32 2048, 2048
      %98 = vsyncadd [#allocation12], %s97
      %s99 = sshll.u32 [#allocation11], 4
      %s100 = int_to_ptr.vmem [resolvable:$true] %s99
      %105 = dma.hbm_to_vmem [thread:$0]  %s10, 2048, %s100, [#allocation12], 64, 64, 4
    $region45: #{tpu_custom_call.1} parent=1 // pred_fallthru
      _
    // Predicated region
    $region46: #{tpu_custom_call.1} parent=1 // pred_check
      _
    $region47: #{tpu_custom_call.1} parent=1 // pred_check_branch
      %107 = sbr.rel (0) target = $region49
    $region48: #{tpu_custom_call.1} parent=1 // pred_region
      _
    $region49: #{tpu_custom_call.1} parent=1 // pred_fallthru
      _
    // Predicated region
    $region50: #{tpu_custom_call.1} parent=1 // pred_check
      _
    $region51: #{tpu_custom_call.1} parent=1 // pred_check_branch
      %109 = sbr.rel (0) target = $region53
    $region52: #{tpu_custom_call.1} parent=1 // pred_region
      _
    $region53: #{tpu_custom_call.1} parent=1 // pred_fallthru
      _
    // Predicated region
    $region54: #{tpu_custom_call.1} parent=1 // pred_check
      _
    $region55: #{tpu_custom_call.1} parent=1 // pred_check_branch
      %111 = sbr.rel (0) target = $region57
    $region56: #{tpu_custom_call.1} parent=1 // pred_region
      _
    $region57: #{tpu_custom_call.1} parent=1 // pred_fallthru
      _
    // Predicated region
    $region58: #{tpu_custom_call.1} parent=1 // pred_check
      _
    $region59: #{tpu_custom_call.1} parent=1 // pred_check_branch
      %113 = sbr.rel (0) target = $region61
    $region60: #{tpu_custom_call.1} parent=1 // pred_region
      %114 = dma.done [#allocation3], 512
    $region61: #{tpu_custom_call.1} parent=1 // pred_fallthru
      _
    // Predicated region
    $region62: #{tpu_custom_call.1} parent=1 // pred_check
      _
    $region63: #{tpu_custom_call.1} parent=1 // pred_check_branch
      %116 = sbr.rel (0) target = $region65
    $region64: #{tpu_custom_call.1} parent=1 // pred_region
      %117 = dma.done [#allocation6], 512
    $region65: #{tpu_custom_call.1} parent=1 // pred_fallthru
      _
    // Predicated region
    $region66: #{tpu_custom_call.1} parent=1 // pred_check
      _
    $region67: #{tpu_custom_call.1} parent=1 // pred_check_branch
      %119 = sbr.rel (0) target = $region69
    $region68: #{tpu_custom_call.1} parent=1 // pred_region
      %120 = dma.done [#allocation6], 3072
    $region69: #{tpu_custom_call.1} parent=1 // pred_fallthru
      _
    // Predicated region
    $region70: #{tpu_custom_call.1} parent=1 // pred_check
      _
    $region71: #{tpu_custom_call.1} parent=1 // pred_check_branch
      %122 = sbr.rel (0) target = $region73
    $region72: #{tpu_custom_call.1} parent=1 // pred_region
      %123 = dma.done [#allocation9], 1024
    $region73: #{tpu_custom_call.1} parent=1 // pred_fallthru
      _
    // Predicated region
    $region74: #{tpu_custom_call.1} parent=1 // pred_check
      _
    $region75: #{tpu_custom_call.1} parent=1 // pred_check_branch
      %125 = sbr.rel (0) target = $region77
    $region76: #{tpu_custom_call.1} parent=1 // pred_region
      %126 = dma.done [#allocation9], 2048
    $region77: #{tpu_custom_call.1} parent=1 // pred_fallthru
      _
    // Predicated region
    $region78: #{tpu_custom_call.1} parent=1 // pred_check
      _
    $region79: #{tpu_custom_call.1} parent=1 // pred_check_branch
      %128 = sbr.rel (0) target = $region81
    $region80: #{tpu_custom_call.1} parent=1 // pred_region
      %129 = dma.done [#allocation12], 2048
    $region81: #{tpu_custom_call.1} parent=1 // pred_fallthru
      _
    %v131 = vld [vmem:[#allocation2] sm:$0xff]
    %v132 = vld [vmem:[#allocation2 + $0x8] sm:$0xff]
    %v133 = vld [vmem:[#allocation2 + $0x10] sm:$0xff]
    %v134 = vld [vmem:[#allocation2 + $0x18] sm:$0xff]
    %v135 = vpack.c.bf16 %v132, %v131
    %v136 = vpack.c.bf16 %v134, %v133
    %v137 = vld [vmem:[#allocation7] sm:$0xff]
    %v138 = vld [vmem:[#allocation7 + $0x8] sm:$0xf]
    %v139 = vld [vmem:[#allocation7 + $0xc] sm:$0xff]
    %v140 = vld [vmem:[#allocation7 + $0x14] sm:$0xf]
    %v141 = vld [vmem:[#allocation7 + $0x18] sm:$0xff]
    %v142 = vld [vmem:[#allocation7 + $0x20] sm:$0xf]
    %v143 = vld [vmem:[#allocation7 + $0x24] sm:$0xff]
    %v144 = vld [vmem:[#allocation7 + $0x2c] sm:$0xf]
    %v145 = vld [vmem:[#allocation7 + $0x30] sm:$0xff]
    %v146 = vld [vmem:[#allocation7 + $0x38] sm:$0xf]
    %v147 = vld [vmem:[#allocation7 + $0x3c] sm:$0xff]
    %v148 = vld [vmem:[#allocation7 + $0x44] sm:$0xf]
    %v149 = vld [vmem:[#allocation7 + $0x48] sm:$0xff]
    %v150 = vld [vmem:[#allocation7 + $0x50] sm:$0xf]
    %v151 = vld [vmem:[#allocation7 + $0x54] sm:$0xff]
    %v152 = vld [vmem:[#allocation7 + $0x5c] sm:$0xf]
    %v153 = vld [vmem:[#allocation7 + $0x60] sm:$0xff]
    %v154 = vld [vmem:[#allocation7 + $0x68] sm:$0xf]
    %v155 = vld [vmem:[#allocation7 + $0x6c] sm:$0xff]
    %v156 = vld [vmem:[#allocation7 + $0x74] sm:$0xf]
    %v157 = vld [vmem:[#allocation7 + $0x78] sm:$0xff]
    %v158 = vld [vmem:[#allocation7 + $0x80] sm:$0xf]
    %v159 = vld [vmem:[#allocation7 + $0x84] sm:$0xff]
    %v160 = vld [vmem:[#allocation7 + $0x8c] sm:$0xf]
    %v161 = vld [vmem:[#allocation7 + $0x90] sm:$0xff]
    %v162 = vld [vmem:[#allocation7 + $0x98] sm:$0xf]
    %v163 = vld [vmem:[#allocation7 + $0x9c] sm:$0xff]
    %v164 = vld [vmem:[#allocation7 + $0xa4] sm:$0xf]
    %v165 = vld [vmem:[#allocation7 + $0xa8] sm:$0xff]
    %v166 = vld [vmem:[#allocation7 + $0xb0] sm:$0xf]
    %v167 = vld [vmem:[#allocation7 + $0xb4] sm:$0xff]
    %v168 = vld [vmem:[#allocation7 + $0xbc] sm:$0xf]
    %v169 = vld [vmem:[%s3] sm:$0x7]
    %v171 = vlaneseq
    %v172 = vshrl.u32 %v171, 7
    %v173 = vsub.s32 0, %v172
    %v174 = vrot.slane %v169, %v173
    %v175 = vlaneseq
    %v176 = vshrl.u32 %v175, 7
    %v177 = vsub.s32 1, %v176
    %v178 = vrot.slane %v169, %v177
    %v179 = vlaneseq
    %v180 = vshrl.u32 %v179, 7
    %v181 = vsub.s32 2, %v180
    %v182 = vrot.slane %v169, %v181
    %v218 = vunpack.c.l.b16 %v137
    %v219 = vunpack.c.h.b16 %v137
    %v220 = vunpack.c.l.b16 %v138
    %v221 = vunpack.c.l.b16 %v139
    %v222 = vunpack.c.h.b16 %v139
    %v223 = vunpack.c.l.b16 %v140
    %v224 = vunpack.c.l.b16 %v141
    %v225 = vunpack.c.h.b16 %v141
    %v226 = vunpack.c.l.b16 %v142
    %v227 = vunpack.c.l.b16 %v143
    %v228 = vunpack.c.h.b16 %v143
    %v229 = vunpack.c.l.b16 %v144
    %v230 = vunpack.c.l.b16 %v145
    %v231 = vunpack.c.h.b16 %v145
    %v232 = vunpack.c.l.b16 %v146
    %v233 = vunpack.c.l.b16 %v147
    %v234 = vunpack.c.h.b16 %v147
    %v235 = vunpack.c.l.b16 %v148
    %v236 = vunpack.c.l.b16 %v149
    %v237 = vunpack.c.h.b16 %v149
    %v238 = vunpack.c.l.b16 %v150
    %v239 = vunpack.c.l.b16 %v151
    %v240 = vunpack.c.h.b16 %v151
    %v241 = vunpack.c.l.b16 %v152
    %v242 = vunpack.c.l.b16 %v153
    %v243 = vunpack.c.h.b16 %v153
    %v244 = vunpack.c.l.b16 %v154
    %v245 = vunpack.c.l.b16 %v155
    %v246 = vunpack.c.h.b16 %v155
    %v247 = vunpack.c.l.b16 %v156
    %v248 = vunpack.c.l.b16 %v157
    %v249 = vunpack.c.h.b16 %v157
    %v250 = vunpack.c.l.b16 %v158
    %v251 = vunpack.c.l.b16 %v159
    %v252 = vunpack.c.h.b16 %v159
    %v253 = vunpack.c.l.b16 %v160
    %v254 = vunpack.c.l.b16 %v161
    %v255 = vunpack.c.h.b16 %v161
    %v256 = vunpack.c.l.b16 %v162
    %v257 = vunpack.c.l.b16 %v163
    %v258 = vunpack.c.h.b16 %v163
    %v259 = vunpack.c.l.b16 %v164
    %v260 = vunpack.c.l.b16 %v165
    %v261 = vunpack.c.h.b16 %v165
    %v262 = vunpack.c.l.b16 %v166
    %v263 = vunpack.c.l.b16 %v167
    %v264 = vunpack.c.h.b16 %v167
    %v265 = vunpack.c.l.b16 %v168
    %v266 = vpack.c.b16 %v221, %v218
    %v267 = vpack.c.b16 %v222, %v219
    %v268 = vpack.c.b16 %v223, %v220
    %v269 = vpack.c.b16 %v227, %v224
    %v270 = vpack.c.b16 %v228, %v225
    %v271 = vpack.c.b16 %v229, %v226
    %v272 = vpack.c.b16 %v233, %v230
    %v273 = vpack.c.b16 %v234, %v231
    %v274 = vpack.c.b16 %v235, %v232
    %v275 = vpack.c.b16 %v239, %v236
    %v276 = vpack.c.b16 %v240, %v237
    %v277 = vpack.c.b16 %v241, %v238
    %v278 = vpack.c.b16 %v245, %v242
    %v279 = vpack.c.b16 %v246, %v243
    %v280 = vpack.c.b16 %v247, %v244
    %v281 = vpack.c.b16 %v251, %v248
    %v282 = vpack.c.b16 %v252, %v249
    %v283 = vpack.c.b16 %v253, %v250
    %v284 = vpack.c.b16 %v257, %v254
    %v285 = vpack.c.b16 %v258, %v255
    %v286 = vpack.c.b16 %v259, %v256
    %v287 = vpack.c.b16 %v263, %v260
    %v288 = vpack.c.b16 %v264, %v261
    %v289 = vpack.c.b16 %v265, %v262
    %314 = vmatprep.subr.bf16.mxu0 %v288
    %315 = vmatpush1.bf16.msra.mxu0 %v287
    %316 = vmatprep.subr.bf16.mxu0 %v285
    %317 = vmatpush1.bf16.msra.mxu0 %v284
    %318 = vmatprep.subr.bf16.mxu0 %v282
    %319 = vmatpush1.bf16.msra.mxu0 %v281
    %320 = vmatprep.subr.bf16.mxu0 %v279
    %321 = vmatpush1.bf16.msra.mxu0 %v278
    %322 = vmatprep.subr.bf16.mxu0 %v276
    %323 = vmatpush1.bf16.msra.mxu0 %v275
    %324 = vmatprep.subr.bf16.mxu0 %v273
    %325 = vmatpush1.bf16.msra.mxu0 %v272
    %326 = vmatprep.subr.bf16.mxu0 %v270
    %327 = vmatpush1.bf16.msra.mxu0 %v269
    %328 = vmatprep.subr.bf16.mxu0 %v267
    %329 = vmatpush1.bf16.msra.mxu0 %v266
    %330 = vmatprep.subr.bf16.mxu0 0
    %331 = vmatpush2.bf16.msra.mxu0 0
    %332 = vmatprep.subr.bf16.mxu0 0
    %333 = vmatpush2.bf16.msra.mxu0 0
    %334 = vmatprep.subr.bf16.mxu0 0
    %335 = vmatpush2.bf16.msra.mxu0 0
    %336 = vmatprep.subr.bf16.mxu0 0
    %337 = vmatpush2.bf16.msra.mxu0 0
    %338 = vmatprep.subr.bf16.mxu0 0
    %339 = vmatpush2.bf16.msra.mxu0 0
    %340 = vmatprep.subr.bf16.mxu0 0
    %341 = vmatpush2.bf16.msra.mxu0 0
    %342 = vmatprep.subr.bf16.mxu0 0
    %343 = vmatpush2.bf16.msra.mxu0 0
    %344 = vmatprep.subr.bf16.mxu0 0
    %345 = vmatpush2.bf16.msra.mxu0 0
    %346 = vmatprep.mubr.bf16.mxu0 0
    %347 = vmatmul.mubr.bf16.gmra.mxu0 %v135
    %v348 = vpop.f32.mrf.mxu0
    %v349 = vadd.f32 %v174, %v348
    %v350 = vpop.f32.mrf.mxu0
    %v351 = vadd.f32 %v178, %v350
    %v352 = vpop.f32.mrf.mxu0
    %v353 = vadd.f32 %v174, %v352
    %v354 = vpop.f32.mrf.mxu0
    %v355 = vadd.f32 %v178, %v354
    %356 = vmatprep.mubr.bf16.mxu0 0
    %357 = vmatmul.mubr.bf16.gmra.mxu0 %v136
    %v358 = vpop.f32.mrf.mxu0
    %v359 = vadd.f32 %v174, %v358
    %v360 = vpop.f32.mrf.mxu0
    %v361 = vadd.f32 %v178, %v360
    %v362 = vpop.f32.mrf.mxu0
    %v363 = vadd.f32 %v174, %v362
    %v364 = vpop.f32.mrf.mxu0
    %v365 = vadd.f32 %v178, %v364
    %366 = vdwg.mxu0
    %367 = vmatprep.subr.bf16.mxu0 0
    %368 = vmatpush1.bf16.msra.mxu0 %v289
    %369 = vmatprep.subr.bf16.mxu0 0
    %370 = vmatpush1.bf16.msra.mxu0 %v286
    %371 = vmatprep.subr.bf16.mxu0 0
    %372 = vmatpush1.bf16.msra.mxu0 %v283
    %373 = vmatprep.subr.bf16.mxu0 0
    %374 = vmatpush1.bf16.msra.mxu0 %v280
    %375 = vmatprep.subr.bf16.mxu0 0
    %376 = vmatpush1.bf16.msra.mxu0 %v277
    %377 = vmatprep.subr.bf16.mxu0 0
    %378 = vmatpush1.bf16.msra.mxu0 %v274
    %379 = vmatprep.subr.bf16.mxu0 0
    %380 = vmatpush1.bf16.msra.mxu0 %v271
    %381 = vmatprep.subr.bf16.mxu0 0
    %382 = vmatpush1.bf16.msra.mxu0 %v268
    %383 = vmatprep.subr.bf16.mxu0 0
    %384 = vmatpush2.bf16.msra.mxu0 0
    %385 = vmatprep.subr.bf16.mxu0 0
    %386 = vmatpush2.bf16.msra.mxu0 0
    %387 = vmatprep.subr.bf16.mxu0 0
    %388 = vmatpush2.bf16.msra.mxu0 0
    %389 = vmatprep.subr.bf16.mxu0 0
    %390 = vmatpush2.bf16.msra.mxu0 0
    %391 = vmatprep.subr.bf16.mxu0 0
    %392 = vmatpush2.bf16.msra.mxu0 0
    %393 = vmatprep.subr.bf16.mxu0 0
    %394 = vmatpush2.bf16.msra.mxu0 0
    %395 = vmatprep.subr.bf16.mxu0 0
    %396 = vmatpush2.bf16.msra.mxu0 0
    %397 = vmatprep.subr.bf16.mxu0 0
    %398 = vmatpush2.bf16.msra.mxu0 0
    %399 = vmatprep.mubr.bf16.mxu0 0
    %400 = vmatmul.mubr.bf16.gmra.mxu0 %v135
    %v401 = vpop.f32.mrf.mxu0
    %v402 = vadd.f32 %v182, %v401
    %v403 = vpop.f32.mrf.mxu0
    %v404 = vpop.f32.mrf.mxu0
    %v405 = vadd.f32 %v182, %v404
    %v406 = vpop.f32.mrf.mxu0
    %407 = vmatprep.mubr.bf16.mxu0 0
    %408 = vmatmul.mubr.bf16.gmra.mxu0 %v136
    %v409 = vpop.f32.mrf.mxu0
    %v410 = vadd.f32 %v182, %v409
    %v411 = vpop.f32.mrf.mxu0
    %v412 = vpop.f32.mrf.mxu0
    %v413 = vadd.f32 %v182, %v412
    %v414 = vpop.f32.mrf.mxu0
    %415 = vdwg.mxu0
    %416 = vxpose.xlu0.b32.start [1/16] %v349, 128
    %417 = vxpose.xlu0.b32.cont [2/16] %v353, 128
    %418 = vxpose.xlu0.b32.cont [3/16] %v359, 128
    %419 = vxpose.xlu0.b32.cont [4/16] %v363, 128
    %420 = vxpose.xlu0.b32.cont [5/16] 0.0, 128
    %421 = vxpose.xlu0.b32.cont [6/16] 0.0, 128
    %422 = vxpose.xlu0.b32.cont [7/16] 0.0, 128
    %423 = vxpose.xlu0.b32.cont [8/16] 0.0, 128
    %424 = vxpose.xlu0.b32.cont [9/16] 0.0, 128
    %425 = vxpose.xlu0.b32.cont [10/16] 0.0, 128
    %426 = vxpose.xlu0.b32.cont [11/16] 0.0, 128
    %427 = vxpose.xlu0.b32.cont [12/16] 0.0, 128
    %428 = vxpose.xlu0.b32.cont [13/16] 0.0, 128
    %429 = vxpose.xlu0.b32.cont [14/16] 0.0, 128
    %430 = vxpose.xlu0.b32.cont [15/16] 0.0, 128
    %431 = vxpose.xlu0.b32.end [16/16] 0.0, 128
    %v432 = vpop.trf.xlu0
    %v433 = vpop.trf.xlu0
    %v434 = vpop.trf.xlu0
    %v435 = vpop.trf.xlu0
    %v436 = vpop.trf.xlu0
    %v437 = vpop.trf.xlu0
    %v438 = vpop.trf.xlu0
    %v439 = vpop.trf.xlu0
    %v440 = vpop.trf.xlu0
    %v441 = vpop.trf.xlu0
    %v442 = vpop.trf.xlu0
    %v443 = vpop.trf.xlu0
    %v444 = vpop.trf.xlu0
    %v445 = vpop.trf.xlu0
    %v446 = vpop.trf.xlu0
    %v447 = vpop.trf.xlu0
    %448 = vxpose.xlu0.b32.start [1/16] %v351, 128
    %449 = vxpose.xlu0.b32.cont [2/16] %v355, 128
    %450 = vxpose.xlu0.b32.cont [3/16] %v361, 128
    %451 = vxpose.xlu0.b32.cont [4/16] %v365, 128
    %452 = vxpose.xlu0.b32.cont [5/16] 0.0, 128
    %453 = vxpose.xlu0.b32.cont [6/16] 0.0, 128
    %454 = vxpose.xlu0.b32.cont [7/16] 0.0, 128
    %455 = vxpose.xlu0.b32.cont [8/16] 0.0, 128
    %456 = vxpose.xlu0.b32.cont [9/16] 0.0, 128
    %457 = vxpose.xlu0.b32.cont [10/16] 0.0, 128
    %458 = vxpose.xlu0.b32.cont [11/16] 0.0, 128
    %459 = vxpose.xlu0.b32.cont [12/16] 0.0, 128
    %460 = vxpose.xlu0.b32.cont [13/16] 0.0, 128
    %461 = vxpose.xlu0.b32.cont [14/16] 0.0, 128
    %462 = vxpose.xlu0.b32.cont [15/16] 0.0, 128
    %463 = vxpose.xlu0.b32.end [16/16] 0.0, 128
    %v464 = vpop.trf.xlu0
    %v465 = vpop.trf.xlu0
    %v466 = vpop.trf.xlu0
    %v467 = vpop.trf.xlu0
    %v468 = vpop.trf.xlu0
    %v469 = vpop.trf.xlu0
    %v470 = vpop.trf.xlu0
    %v471 = vpop.trf.xlu0
    %v472 = vpop.trf.xlu0
    %v473 = vpop.trf.xlu0
    %v474 = vpop.trf.xlu0
    %v475 = vpop.trf.xlu0
    %v476 = vpop.trf.xlu0
    %v477 = vpop.trf.xlu0
    %v478 = vpop.trf.xlu0
    %v479 = vpop.trf.xlu0
    %480 = vxpose.xlu0.b32.start [1/16] %v402, 128
    %481 = vxpose.xlu0.b32.cont [2/16] %v405, 128
    %482 = vxpose.xlu0.b32.cont [3/16] %v410, 128
    %483 = vxpose.xlu0.b32.cont [4/16] %v413, 128
    %484 = vxpose.xlu0.b32.cont [5/16] 0.0, 128
    %485 = vxpose.xlu0.b32.cont [6/16] 0.0, 128
    %486 = vxpose.xlu0.b32.cont [7/16] 0.0, 128
    %487 = vxpose.xlu0.b32.cont [8/16] 0.0, 128
    %488 = vxpose.xlu0.b32.cont [9/16] 0.0, 128
    %489 = vxpose.xlu0.b32.cont [10/16] 0.0, 128
    %490 = vxpose.xlu0.b32.cont [11/16] 0.0, 128
    %491 = vxpose.xlu0.b32.cont [12/16] 0.0, 128
    %492 = vxpose.xlu0.b32.cont [13/16] 0.0, 128
    %493 = vxpose.xlu0.b32.cont [14/16] 0.0, 128
    %494 = vxpose.xlu0.b32.cont [15/16] 0.0, 128
    %495 = vxpose.xlu0.b32.end [16/16] 0.0, 128
    %v496 = vpop.trf.xlu0
    %v497 = vpop.trf.xlu0
    %v498 = vpop.trf.xlu0
    %v499 = vpop.trf.xlu0
    %v500 = vpop.trf.xlu0
    %v501 = vpop.trf.xlu0
    %v502 = vpop.trf.xlu0
    %v503 = vpop.trf.xlu0
    %v504 = vpop.trf.xlu0
    %v505 = vpop.trf.xlu0
    %v506 = vpop.trf.xlu0
    %v507 = vpop.trf.xlu0
    %v508 = vpop.trf.xlu0
    %v509 = vpop.trf.xlu0
    %v510 = vpop.trf.xlu0
    %v511 = vpop.trf.xlu0
    %v512 = vpack.c.bf16 %v433, %v432
    %v513 = vpack.c.bf16 %v435, %v434
    %v514 = vpack.c.bf16 %v437, %v436
    %v515 = vpack.c.bf16 %v439, %v438
    %v516 = vpack.c.bf16 %v441, %v440
    %v517 = vpack.c.bf16 %v443, %v442
    %v518 = vpack.c.bf16 %v445, %v444
    %v519 = vpack.c.bf16 %v447, %v446
    %v520 = vpack.c.bf16 %v465, %v464
    %v521 = vpack.c.bf16 %v467, %v466
    %v522 = vpack.c.bf16 %v469, %v468
    %v523 = vpack.c.bf16 %v471, %v470
    %v524 = vpack.c.bf16 %v473, %v472
    %v525 = vpack.c.bf16 %v475, %v474
    %v526 = vpack.c.bf16 %v477, %v476
    %v527 = vpack.c.bf16 %v479, %v478
    %v528 = vpack.c.bf16 %v497, %v496
    %v529 = vpack.c.bf16 %v499, %v498
    %v530 = vpack.c.bf16 %v501, %v500
    %v531 = vpack.c.bf16 %v503, %v502
    %v532 = vpack.c.bf16 %v505, %v504
    %v533 = vpack.c.bf16 %v507, %v506
    %v534 = vpack.c.bf16 %v509, %v508
    %v535 = vpack.c.bf16 %v511, %v510
    %v536 = vld [vmem:[#allocation5] sm:$0xff]
    %v537 = vld [vmem:[#allocation5 + $0x8] sm:$0xff]
    %v538 = vld [vmem:[#allocation5 + $0x10] sm:$0xff]
    %v539 = vld [vmem:[#allocation5 + $0x18] sm:$0xff]
    %540 = vxpose.xlu0.c.b16.start [1/8] %v512, 128
    %541 = vxpose.xlu0.c.b16.cont [2/8] 0, 128
    %542 = vxpose.xlu0.c.b16.cont [3/8] 0, 128
    %543 = vxpose.xlu0.c.b16.cont [4/8] 0, 128
    %544 = vxpose.xlu0.c.b16.cont [5/8] 0, 128
    %545 = vxpose.xlu0.c.b16.cont [6/8] 0, 128
    %546 = vxpose.xlu0.c.b16.cont [7/8] 0, 128
    %547 = vxpose.xlu0.c.b16.end [8/8] 0, 128
    %v548 = vpop.trf.xlu0
    %v549 = vpop.trf.xlu0
    %v550 = vpop.trf.xlu0
    %v551 = vpop.trf.xlu0
    %v552 = vpop.trf.xlu0
    %v553 = vpop.trf.xlu0
    %v554 = vpop.trf.xlu0
    %v555 = vpop.trf.xlu0
    %vm556 = vcmask 130048
    %v558 = vsel %vm556, %v548, 0
    %v561 = vsel %vm556, %v549, 0
    %563 = vmatprep.subr.bf16.mxu0 0
    %564 = vmatpush1.bf16.msra.mxu0 0
    %565 = vmatprep.subr.bf16.mxu0 0
    %566 = vmatpush1.bf16.msra.mxu0 0
    %567 = vmatprep.subr.bf16.mxu0 0
    %568 = vmatpush1.bf16.msra.mxu0 0
    %569 = vmatprep.subr.bf16.mxu0 0
    %570 = vmatpush1.bf16.msra.mxu0 0
    %571 = vmatprep.subr.bf16.mxu0 0
    %572 = vmatpush1.bf16.msra.mxu0 0
    %573 = vmatprep.subr.bf16.mxu0 0
    %574 = vmatpush1.bf16.msra.mxu0 0
    %575 = vmatprep.subr.bf16.mxu0 0
    %576 = vmatpush1.bf16.msra.mxu0 0
    %577 = vmatprep.subr.bf16.mxu0 0
    %578 = vmatpush1.bf16.msra.mxu0 %v520
    %579 = vmatprep.subr.bf16.mxu0 0
    %580 = vmatpush2.bf16.msra.mxu0 0
    %581 = vmatprep.subr.bf16.mxu0 0
    %582 = vmatpush2.bf16.msra.mxu0 0
    %583 = vmatprep.subr.bf16.mxu0 0
    %584 = vmatpush2.bf16.msra.mxu0 0
    %585 = vmatprep.subr.bf16.mxu0 0
    %586 = vmatpush2.bf16.msra.mxu0 0
    %587 = vmatprep.subr.bf16.mxu0 0
    %588 = vmatpush2.bf16.msra.mxu0 0
    %589 = vmatprep.subr.bf16.mxu0 0
    %590 = vmatpush2.bf16.msra.mxu0 0
    %591 = vmatprep.subr.bf16.mxu0 0
    %592 = vmatpush2.bf16.msra.mxu0 0
    %593 = vmatprep.subr.bf16.mxu0 0
    %594 = vmatpush2.bf16.msra.mxu0 0
    %595 = vmatprep.mubr.bf16.mxu0 0
    %596 = vmatmul.mubr.bf16.gmra.mxu0 %v558
    %v597 = vpop.f32.mrf.mxu0
    %v598 = vadd.f32 %v536, %v597
    %v599 = vpop.f32.mrf.mxu0
    %v600 = vpop.f32.mrf.mxu0
    %v601 = vadd.f32 %v537, %v600
    %v602 = vpop.f32.mrf.mxu0
    %603 = vmatprep.mubr.bf16.mxu0 0
    %604 = vmatmul.mubr.bf16.gmra.mxu0 %v561
    %v605 = vpop.f32.mrf.mxu0
    %v606 = vadd.f32 %v538, %v605
    %v607 = vpop.f32.mrf.mxu0
    %v608 = vpop.f32.mrf.mxu0
    %v609 = vadd.f32 %v539, %v608
    %v610 = vpop.f32.mrf.mxu0
    %611 = vdwg.mxu0
    %612 = vxpose.xlu0.c.b16.start [1/8] %v513, 128
    %613 = vxpose.xlu0.c.b16.cont [2/8] 0, 128
    %614 = vxpose.xlu0.c.b16.cont [3/8] 0, 128
    %615 = vxpose.xlu0.c.b16.cont [4/8] 0, 128
    %616 = vxpose.xlu0.c.b16.cont [5/8] 0, 128
    %617 = vxpose.xlu0.c.b16.cont [6/8] 0, 128
    %618 = vxpose.xlu0.c.b16.cont [7/8] 0, 128
    %619 = vxpose.xlu0.c.b16.end [8/8] 0, 128
    %v620 = vpop.trf.xlu0
    %v621 = vpop.trf.xlu0
    %v622 = vpop.trf.xlu0
    %v623 = vpop.trf.xlu0
    %v624 = vpop.trf.xlu0
    %v625 = vpop.trf.xlu0
    %v626 = vpop.trf.xlu0
    %v627 = vpop.trf.xlu0
    %v629 = vsel %vm556, %v620, 0
    %v632 = vsel %vm556, %v621, 0
    %634 = vmatprep.subr.bf16.mxu0 0
    %635 = vmatpush1.bf16.msra.mxu0 0
    %636 = vmatprep.subr.bf16.mxu0 0
    %637 = vmatpush1.bf16.msra.mxu0 0
    %638 = vmatprep.subr.bf16.mxu0 0
    %639 = vmatpush1.bf16.msra.mxu0 0
    %640 = vmatprep.subr.bf16.mxu0 0
    %641 = vmatpush1.bf16.msra.mxu0 0
    %642 = vmatprep.subr.bf16.mxu0 0
    %643 = vmatpush1.bf16.msra.mxu0 0
    %644 = vmatprep.subr.bf16.mxu0 0
    %645 = vmatpush1.bf16.msra.mxu0 0
    %646 = vmatprep.subr.bf16.mxu0 0
    %647 = vmatpush1.bf16.msra.mxu0 0
    %648 = vmatprep.subr.bf16.mxu0 0
    %649 = vmatpush1.bf16.msra.mxu0 %v521
    %650 = vmatprep.subr.bf16.mxu0 0
    %651 = vmatpush2.bf16.msra.mxu0 0
    %652 = vmatprep.subr.bf16.mxu0 0
    %653 = vmatpush2.bf16.msra.mxu0 0
    %654 = vmatprep.subr.bf16.mxu0 0
    %655 = vmatpush2.bf16.msra.mxu0 0
    %656 = vmatprep.subr.bf16.mxu0 0
    %657 = vmatpush2.bf16.msra.mxu0 0
    %658 = vmatprep.subr.bf16.mxu0 0
    %659 = vmatpush2.bf16.msra.mxu0 0
    %660 = vmatprep.subr.bf16.mxu0 0
    %661 = vmatpush2.bf16.msra.mxu0 0
    %662 = vmatprep.subr.bf16.mxu0 0
    %663 = vmatpush2.bf16.msra.mxu0 0
    %664 = vmatprep.subr.bf16.mxu0 0
    %665 = vmatpush2.bf16.msra.mxu0 0
    %666 = vmatprep.mubr.bf16.mxu0 0
    %667 = vmatmul.mubr.bf16.gmra.mxu0 %v629
    %v668 = vpop.f32.mrf.mxu0
    %v669 = vadd.f32 %v536, %v668
    %v670 = vpop.f32.mrf.mxu0
    %v671 = vpop.f32.mrf.mxu0
    %v672 = vadd.f32 %v537, %v671
    %v673 = vpop.f32.mrf.mxu0
    %674 = vmatprep.mubr.bf16.mxu0 0
    %675 = vmatmul.mubr.bf16.gmra.mxu0 %v632
    %v676 = vpop.f32.mrf.mxu0
    %v677 = vadd.f32 %v538, %v676
    %v678 = vpop.f32.mrf.mxu0
    %v679 = vpop.f32.mrf.mxu0
    %v680 = vadd.f32 %v539, %v679
    %v681 = vpop.f32.mrf.mxu0
    %682 = vdwg.mxu0
    %683 = vxpose.xlu0.c.b16.start [1/8] %v514, 128
    %684 = vxpose.xlu0.c.b16.cont [2/8] 0, 128
    %685 = vxpose.xlu0.c.b16.cont [3/8] 0, 128
    %686 = vxpose.xlu0.c.b16.cont [4/8] 0, 128
    %687 = vxpose.xlu0.c.b16.cont [5/8] 0, 128
    %688 = vxpose.xlu0.c.b16.cont [6/8] 0, 128
    %689 = vxpose.xlu0.c.b16.cont [7/8] 0, 128
    %690 = vxpose.xlu0.c.b16.end [8/8] 0, 128
    %v691 = vpop.trf.xlu0
    %v692 = vpop.trf.xlu0
    %v693 = vpop.trf.xlu0
    %v694 = vpop.trf.xlu0
    %v695 = vpop.trf.xlu0
    %v696 = vpop.trf.xlu0
    %v697 = vpop.trf.xlu0
    %v698 = vpop.trf.xlu0
    %v700 = vsel %vm556, %v691, 0
    %v703 = vsel %vm556, %v692, 0
    %705 = vmatprep.subr.bf16.mxu0 0
    %706 = vmatpush1.bf16.msra.mxu0 0
    %707 = vmatprep.subr.bf16.mxu0 0
    %708 = vmatpush1.bf16.msra.mxu0 0
    %709 = vmatprep.subr.bf16.mxu0 0
    %710 = vmatpush1.bf16.msra.mxu0 0
    %711 = vmatprep.subr.bf16.mxu0 0
    %712 = vmatpush1.bf16.msra.mxu0 0
    %713 = vmatprep.subr.bf16.mxu0 0
    %714 = vmatpush1.bf16.msra.mxu0 0
    %715 = vmatprep.subr.bf16.mxu0 0
    %716 = vmatpush1.bf16.msra.mxu0 0
    %717 = vmatprep.subr.bf16.mxu0 0
    %718 = vmatpush1.bf16.msra.mxu0 0
    %719 = vmatprep.subr.bf16.mxu0 0
    %720 = vmatpush1.bf16.msra.mxu0 %v522
    %721 = vmatprep.subr.bf16.mxu0 0
    %722 = vmatpush2.bf16.msra.mxu0 0
    %723 = vmatprep.subr.bf16.mxu0 0
    %724 = vmatpush2.bf16.msra.mxu0 0
    %725 = vmatprep.subr.bf16.mxu0 0
    %726 = vmatpush2.bf16.msra.mxu0 0
    %727 = vmatprep.subr.bf16.mxu0 0
    %728 = vmatpush2.bf16.msra.mxu0 0
    %729 = vmatprep.subr.bf16.mxu0 0
    %730 = vmatpush2.bf16.msra.mxu0 0
    %731 = vmatprep.subr.bf16.mxu0 0
    %732 = vmatpush2.bf16.msra.mxu0 0
    %733 = vmatprep.subr.bf16.mxu0 0
    %734 = vmatpush2.bf16.msra.mxu0 0
    %735 = vmatprep.subr.bf16.mxu0 0
    %736 = vmatpush2.bf16.msra.mxu0 0
    %737 = vmatprep.mubr.bf16.mxu0 0
    %738 = vmatmul.mubr.bf16.gmra.mxu0 %v700
    %v739 = vpop.f32.mrf.mxu0
    %v740 = vadd.f32 %v536, %v739
    %v741 = vpop.f32.mrf.mxu0
    %v742 = vpop.f32.mrf.mxu0
    %v743 = vadd.f32 %v537, %v742
    %v744 = vpop.f32.mrf.mxu0
    %745 = vmatprep.mubr.bf16.mxu0 0
    %746 = vmatmul.mubr.bf16.gmra.mxu0 %v703
    %v747 = vpop.f32.mrf.mxu0
    %v748 = vadd.f32 %v538, %v747
    %v749 = vpop.f32.mrf.mxu0
    %v750 = vpop.f32.mrf.mxu0
    %v751 = vadd.f32 %v539, %v750
    %v752 = vpop.f32.mrf.mxu0
    %753 = vdwg.mxu0
    %754 = vxpose.xlu0.c.b16.start [1/8] %v515, 128
    %755 = vxpose.xlu0.c.b16.cont [2/8] 0, 128
    %756 = vxpose.xlu0.c.b16.cont [3/8] 0, 128
    %757 = vxpose.xlu0.c.b16.cont [4/8] 0, 128
    %758 = vxpose.xlu0.c.b16.cont [5/8] 0, 128
    %759 = vxpose.xlu0.c.b16.cont [6/8] 0, 128
    %760 = vxpose.xlu0.c.b16.cont [7/8] 0, 128
    %761 = vxpose.xlu0.c.b16.end [8/8] 0, 128
    %v762 = vpop.trf.xlu0
    %v763 = vpop.trf.xlu0
    %v764 = vpop.trf.xlu0
    %v765 = vpop.trf.xlu0
    %v766 = vpop.trf.xlu0
    %v767 = vpop.trf.xlu0
    %v768 = vpop.trf.xlu0
    %v769 = vpop.trf.xlu0
    %v771 = vsel %vm556, %v762, 0
    %v774 = vsel %vm556, %v763, 0
    %776 = vmatprep.subr.bf16.mxu0 0
    %777 = vmatpush1.bf16.msra.mxu0 0
    %778 = vmatprep.subr.bf16.mxu0 0
    %779 = vmatpush1.bf16.msra.mxu0 0
    %780 = vmatprep.subr.bf16.mxu0 0
    %781 = vmatpush1.bf16.msra.mxu0 0
    %782 = vmatprep.subr.bf16.mxu0 0
    %783 = vmatpush1.bf16.msra.mxu0 0
    %784 = vmatprep.subr.bf16.mxu0 0
    %785 = vmatpush1.bf16.msra.mxu0 0
    %786 = vmatprep.subr.bf16.mxu0 0
    %787 = vmatpush1.bf16.msra.mxu0 0
    %788 = vmatprep.subr.bf16.mxu0 0
    %789 = vmatpush1.bf16.msra.mxu0 0
    %790 = vmatprep.subr.bf16.mxu0 0
    %791 = vmatpush1.bf16.msra.mxu0 %v523
    %792 = vmatprep.subr.bf16.mxu0 0
    %793 = vmatpush2.bf16.msra.mxu0 0
    %794 = vmatprep.subr.bf16.mxu0 0
    %795 = vmatpush2.bf16.msra.mxu0 0
    %796 = vmatprep.subr.bf16.mxu0 0
    %797 = vmatpush2.bf16.msra.mxu0 0
    %798 = vmatprep.subr.bf16.mxu0 0
    %799 = vmatpush2.bf16.msra.mxu0 0
    %800 = vmatprep.subr.bf16.mxu0 0
    %801 = vmatpush2.bf16.msra.mxu0 0
    %802 = vmatprep.subr.bf16.mxu0 0
    %803 = vmatpush2.bf16.msra.mxu0 0
    %804 = vmatprep.subr.bf16.mxu0 0
    %805 = vmatpush2.bf16.msra.mxu0 0
    %806 = vmatprep.subr.bf16.mxu0 0
    %807 = vmatpush2.bf16.msra.mxu0 0
    %808 = vmatprep.mubr.bf16.mxu0 0
    %809 = vmatmul.mubr.bf16.gmra.mxu0 %v771
    %v810 = vpop.f32.mrf.mxu0
    %v811 = vadd.f32 %v536, %v810
    %v812 = vpop.f32.mrf.mxu0
    %v813 = vpop.f32.mrf.mxu0
    %v814 = vadd.f32 %v537, %v813
    %v815 = vpop.f32.mrf.mxu0
    %816 = vmatprep.mubr.bf16.mxu0 0
    %817 = vmatmul.mubr.bf16.gmra.mxu0 %v774
    %v818 = vpop.f32.mrf.mxu0
    %v819 = vadd.f32 %v538, %v818
    %v820 = vpop.f32.mrf.mxu0
    %v821 = vpop.f32.mrf.mxu0
    %v822 = vadd.f32 %v539, %v821
    %v823 = vpop.f32.mrf.mxu0
    %824 = vdwg.mxu0
    %825 = vxpose.xlu0.c.b16.start [1/8] %v516, 128
    %826 = vxpose.xlu0.c.b16.cont [2/8] 0, 128
    %827 = vxpose.xlu0.c.b16.cont [3/8] 0, 128
    %828 = vxpose.xlu0.c.b16.cont [4/8] 0, 128
    %829 = vxpose.xlu0.c.b16.cont [5/8] 0, 128
    %830 = vxpose.xlu0.c.b16.cont [6/8] 0, 128
    %831 = vxpose.xlu0.c.b16.cont [7/8] 0, 128
    %832 = vxpose.xlu0.c.b16.end [8/8] 0, 128
    %v833 = vpop.trf.xlu0
    %v834 = vpop.trf.xlu0
    %v835 = vpop.trf.xlu0
    %v836 = vpop.trf.xlu0
    %v837 = vpop.trf.xlu0
    %v838 = vpop.trf.xlu0
    %v839 = vpop.trf.xlu0
    %v840 = vpop.trf.xlu0
    %v842 = vsel %vm556, %v833, 0
    %v845 = vsel %vm556, %v834, 0
    %847 = vmatprep.subr.bf16.mxu0 0
    %848 = vmatpush1.bf16.msra.mxu0 0
    %849 = vmatprep.subr.bf16.mxu0 0
    %850 = vmatpush1.bf16.msra.mxu0 0
    %851 = vmatprep.subr.bf16.mxu0 0
    %852 = vmatpush1.bf16.msra.mxu0 0
    %853 = vmatprep.subr.bf16.mxu0 0
    %854 = vmatpush1.bf16.msra.mxu0 0
    %855 = vmatprep.subr.bf16.mxu0 0
    %856 = vmatpush1.bf16.msra.mxu0 0
    %857 = vmatprep.subr.bf16.mxu0 0
    %858 = vmatpush1.bf16.msra.mxu0 0
    %859 = vmatprep.subr.bf16.mxu0 0
    %860 = vmatpush1.bf16.msra.mxu0 0
    %861 = vmatprep.subr.bf16.mxu0 0
    %862 = vmatpush1.bf16.msra.mxu0 %v524
    %863 = vmatprep.subr.bf16.mxu0 0
    %864 = vmatpush2.bf16.msra.mxu0 0
    %865 = vmatprep.subr.bf16.mxu0 0
    %866 = vmatpush2.bf16.msra.mxu0 0
    %867 = vmatprep.subr.bf16.mxu0 0
    %868 = vmatpush2.bf16.msra.mxu0 0
    %869 = vmatprep.subr.bf16.mxu0 0
    %870 = vmatpush2.bf16.msra.mxu0 0
    %871 = vmatprep.subr.bf16.mxu0 0
    %872 = vmatpush2.bf16.msra.mxu0 0
    %873 = vmatprep.subr.bf16.mxu0 0
    %874 = vmatpush2.bf16.msra.mxu0 0
    %875 = vmatprep.subr.bf16.mxu0 0
    %876 = vmatpush2.bf16.msra.mxu0 0
    %877 = vmatprep.subr.bf16.mxu0 0
    %878 = vmatpush2.bf16.msra.mxu0 0
    %879 = vmatprep.mubr.bf16.mxu0 0
    %880 = vmatmul.mubr.bf16.gmra.mxu0 %v842
    %v881 = vpop.f32.mrf.mxu0
    %v882 = vadd.f32 %v536, %v881
    %v883 = vpop.f32.mrf.mxu0
    %v884 = vpop.f32.mrf.mxu0
    %v885 = vadd.f32 %v537, %v884
    %v886 = vpop.f32.mrf.mxu0
    %887 = vmatprep.mubr.bf16.mxu0 0
    %888 = vmatmul.mubr.bf16.gmra.mxu0 %v845
    %v889 = vpop.f32.mrf.mxu0
    %v890 = vadd.f32 %v538, %v889
    %v891 = vpop.f32.mrf.mxu0
    %v892 = vpop.f32.mrf.mxu0
    %v893 = vadd.f32 %v539, %v892
    %v894 = vpop.f32.mrf.mxu0
    %895 = vdwg.mxu0
    %896 = vxpose.xlu0.c.b16.start [1/8] %v517, 128
    %897 = vxpose.xlu0.c.b16.cont [2/8] 0, 128
    %898 = vxpose.xlu0.c.b16.cont [3/8] 0, 128
    %899 = vxpose.xlu0.c.b16.cont [4/8] 0, 128
    %900 = vxpose.xlu0.c.b16.cont [5/8] 0, 128
    %901 = vxpose.xlu0.c.b16.cont [6/8] 0, 128
    %902 = vxpose.xlu0.c.b16.cont [7/8] 0, 128
    %903 = vxpose.xlu0.c.b16.end [8/8] 0, 128
    %v904 = vpop.trf.xlu0
    %v905 = vpop.trf.xlu0
    %v906 = vpop.trf.xlu0
    %v907 = vpop.trf.xlu0
    %v908 = vpop.trf.xlu0
    %v909 = vpop.trf.xlu0
    %v910 = vpop.trf.xlu0
    %v911 = vpop.trf.xlu0
    %v913 = vsel %vm556, %v904, 0
    %v916 = vsel %vm556, %v905, 0
    %918 = vmatprep.subr.bf16.mxu0 0
    %919 = vmatpush1.bf16.msra.mxu0 0
    %920 = vmatprep.subr.bf16.mxu0 0
    %921 = vmatpush1.bf16.msra.mxu0 0
    %922 = vmatprep.subr.bf16.mxu0 0
    %923 = vmatpush1.bf16.msra.mxu0 0
    %924 = vmatprep.subr.bf16.mxu0 0
    %925 = vmatpush1.bf16.msra.mxu0 0
    %926 = vmatprep.subr.bf16.mxu0 0
    %927 = vmatpush1.bf16.msra.mxu0 0
    %928 = vmatprep.subr.bf16.mxu0 0
    %929 = vmatpush1.bf16.msra.mxu0 0
    %930 = vmatprep.subr.bf16.mxu0 0
    %931 = vmatpush1.bf16.msra.mxu0 0
    %932 = vmatprep.subr.bf16.mxu0 0
    %933 = vmatpush1.bf16.msra.mxu0 %v525
    %934 = vmatprep.subr.bf16.mxu0 0
    %935 = vmatpush2.bf16.msra.mxu0 0
    %936 = vmatprep.subr.bf16.mxu0 0
    %937 = vmatpush2.bf16.msra.mxu0 0
    %938 = vmatprep.subr.bf16.mxu0 0
    %939 = vmatpush2.bf16.msra.mxu0 0
    %940 = vmatprep.subr.bf16.mxu0 0
    %941 = vmatpush2.bf16.msra.mxu0 0
    %942 = vmatprep.subr.bf16.mxu0 0
    %943 = vmatpush2.bf16.msra.mxu0 0
    %944 = vmatprep.subr.bf16.mxu0 0
    %945 = vmatpush2.bf16.msra.mxu0 0
    %946 = vmatprep.subr.bf16.mxu0 0
    %947 = vmatpush2.bf16.msra.mxu0 0
    %948 = vmatprep.subr.bf16.mxu0 0
    %949 = vmatpush2.bf16.msra.mxu0 0
    %950 = vmatprep.mubr.bf16.mxu0 0
    %951 = vmatmul.mubr.bf16.gmra.mxu0 %v913
    %v952 = vpop.f32.mrf.mxu0
    %v953 = vadd.f32 %v536, %v952
    %v954 = vpop.f32.mrf.mxu0
    %v955 = vpop.f32.mrf.mxu0
    %v956 = vadd.f32 %v537, %v955
    %v957 = vpop.f32.mrf.mxu0
    %958 = vmatprep.mubr.bf16.mxu0 0
    %959 = vmatmul.mubr.bf16.gmra.mxu0 %v916
    %v960 = vpop.f32.mrf.mxu0
    %v961 = vadd.f32 %v538, %v960
    %v962 = vpop.f32.mrf.mxu0
    %v963 = vpop.f32.mrf.mxu0
    %v964 = vadd.f32 %v539, %v963
    %v965 = vpop.f32.mrf.mxu0
    %966 = vdwg.mxu0
    %967 = vxpose.xlu0.c.b16.start [1/8] %v518, 128
    %968 = vxpose.xlu0.c.b16.cont [2/8] 0, 128
    %969 = vxpose.xlu0.c.b16.cont [3/8] 0, 128
    %970 = vxpose.xlu0.c.b16.cont [4/8] 0, 128
    %971 = vxpose.xlu0.c.b16.cont [5/8] 0, 128
    %972 = vxpose.xlu0.c.b16.cont [6/8] 0, 128
    %973 = vxpose.xlu0.c.b16.cont [7/8] 0, 128
    %974 = vxpose.xlu0.c.b16.end [8/8] 0, 128
    %v975 = vpop.trf.xlu0
    %v976 = vpop.trf.xlu0
    %v977 = vpop.trf.xlu0
    %v978 = vpop.trf.xlu0
    %v979 = vpop.trf.xlu0
    %v980 = vpop.trf.xlu0
    %v981 = vpop.trf.xlu0
    %v982 = vpop.trf.xlu0
    %v984 = vsel %vm556, %v975, 0
    %v987 = vsel %vm556, %v976, 0
    %989 = vmatprep.subr.bf16.mxu0 0
    %990 = vmatpush1.bf16.msra.mxu0 0
    %991 = vmatprep.subr.bf16.mxu0 0
    %992 = vmatpush1.bf16.msra.mxu0 0
    %993 = vmatprep.subr.bf16.mxu0 0
    %994 = vmatpush1.bf16.msra.mxu0 0
    %995 = vmatprep.subr.bf16.mxu0 0
    %996 = vmatpush1.bf16.msra.mxu0 0
    %997 = vmatprep.subr.bf16.mxu0 0
    %998 = vmatpush1.bf16.msra.mxu0 0
    %999 = vmatprep.subr.bf16.mxu0 0
    %1000 = vmatpush1.bf16.msra.mxu0 0
    %1001 = vmatprep.subr.bf16.mxu0 0
    %1002 = vmatpush1.bf16.msra.mxu0 0
    %1003 = vmatprep.subr.bf16.mxu0 0
    %1004 = vmatpush1.bf16.msra.mxu0 %v526
    %1005 = vmatprep.subr.bf16.mxu0 0
    %1006 = vmatpush2.bf16.msra.mxu0 0
    %1007 = vmatprep.subr.bf16.mxu0 0
    %1008 = vmatpush2.bf16.msra.mxu0 0
    %1009 = vmatprep.subr.bf16.mxu0 0
    %1010 = vmatpush2.bf16.msra.mxu0 0
    %1011 = vmatprep.subr.bf16.mxu0 0
    %1012 = vmatpush2.bf16.msra.mxu0 0
    %1013 = vmatprep.subr.bf16.mxu0 0
    %1014 = vmatpush2.bf16.msra.mxu0 0
    %1015 = vmatprep.subr.bf16.mxu0 0
    %1016 = vmatpush2.bf16.msra.mxu0 0
    %1017 = vmatprep.subr.bf16.mxu0 0
    %1018 = vmatpush2.bf16.msra.mxu0 0
    %1019 = vmatprep.subr.bf16.mxu0 0
    %1020 = vmatpush2.bf16.msra.mxu0 0
    %1021 = vmatprep.mubr.bf16.mxu0 0
    %1022 = vmatmul.mubr.bf16.gmra.mxu0 %v984
    %v1023 = vpop.f32.mrf.mxu0
    %v1024 = vadd.f32 %v536, %v1023
    %v1025 = vpop.f32.mrf.mxu0
    %v1026 = vpop.f32.mrf.mxu0
    %v1027 = vadd.f32 %v537, %v1026
    %v1028 = vpop.f32.mrf.mxu0
    %1029 = vmatprep.mubr.bf16.mxu0 0
    %1030 = vmatmul.mubr.bf16.gmra.mxu0 %v987
    %v1031 = vpop.f32.mrf.mxu0
    %v1032 = vadd.f32 %v538, %v1031
    %v1033 = vpop.f32.mrf.mxu0
    %v1034 = vpop.f32.mrf.mxu0
    %v1035 = vadd.f32 %v539, %v1034
    %v1036 = vpop.f32.mrf.mxu0
    %1037 = vdwg.mxu0
    %1038 = vxpose.xlu0.c.b16.start [1/8] %v519, 128
    %1039 = vxpose.xlu0.c.b16.cont [2/8] 0, 128
    %1040 = vxpose.xlu0.c.b16.cont [3/8] 0, 128
    %1041 = vxpose.xlu0.c.b16.cont [4/8] 0, 128
    %1042 = vxpose.xlu0.c.b16.cont [5/8] 0, 128
    %1043 = vxpose.xlu0.c.b16.cont [6/8] 0, 128
    %1044 = vxpose.xlu0.c.b16.cont [7/8] 0, 128
    %1045 = vxpose.xlu0.c.b16.end [8/8] 0, 128
    %v1046 = vpop.trf.xlu0
    %v1047 = vpop.trf.xlu0
    %v1048 = vpop.trf.xlu0
    %v1049 = vpop.trf.xlu0
    %v1050 = vpop.trf.xlu0
    %v1051 = vpop.trf.xlu0
    %v1052 = vpop.trf.xlu0
    %v1053 = vpop.trf.xlu0
    %v1055 = vsel %vm556, %v1046, 0
    %v1058 = vsel %vm556, %v1047, 0
    %1060 = vmatprep.subr.bf16.mxu0 0
    %1061 = vmatpush1.bf16.msra.mxu0 0
    %1062 = vmatprep.subr.bf16.mxu0 0
    %1063 = vmatpush1.bf16.msra.mxu0 0
    %1064 = vmatprep.subr.bf16.mxu0 0
    %1065 = vmatpush1.bf16.msra.mxu0 0
    %1066 = vmatprep.subr.bf16.mxu0 0
    %1067 = vmatpush1.bf16.msra.mxu0 0
    %1068 = vmatprep.subr.bf16.mxu0 0
    %1069 = vmatpush1.bf16.msra.mxu0 0
    %1070 = vmatprep.subr.bf16.mxu0 0
    %1071 = vmatpush1.bf16.msra.mxu0 0
    %1072 = vmatprep.subr.bf16.mxu0 0
    %1073 = vmatpush1.bf16.msra.mxu0 0
    %1074 = vmatprep.subr.bf16.mxu0 0
    %1075 = vmatpush1.bf16.msra.mxu0 %v527
    %1076 = vmatprep.subr.bf16.mxu0 0
    %1077 = vmatpush2.bf16.msra.mxu0 0
    %1078 = vmatprep.subr.bf16.mxu0 0
    %1079 = vmatpush2.bf16.msra.mxu0 0
    %1080 = vmatprep.subr.bf16.mxu0 0
    %1081 = vmatpush2.bf16.msra.mxu0 0
    %1082 = vmatprep.subr.bf16.mxu0 0
    %1083 = vmatpush2.bf16.msra.mxu0 0
    %1084 = vmatprep.subr.bf16.mxu0 0
    %1085 = vmatpush2.bf16.msra.mxu0 0
    %1086 = vmatprep.subr.bf16.mxu0 0
    %1087 = vmatpush2.bf16.msra.mxu0 0
    %1088 = vmatprep.subr.bf16.mxu0 0
    %1089 = vmatpush2.bf16.msra.mxu0 0
    %1090 = vmatprep.subr.bf16.mxu0 0
    %1091 = vmatpush2.bf16.msra.mxu0 0
    %1092 = vmatprep.mubr.bf16.mxu0 0
    %1093 = vmatmul.mubr.bf16.gmra.mxu0 %v1055
    %v1094 = vpop.f32.mrf.mxu0
    %v1095 = vadd.f32 %v536, %v1094
    %v1096 = vpop.f32.mrf.mxu0
    %v1097 = vpop.f32.mrf.mxu0
    %v1098 = vadd.f32 %v537, %v1097
    %v1099 = vpop.f32.mrf.mxu0
    %1100 = vmatprep.mubr.bf16.mxu0 0
    %1101 = vmatmul.mubr.bf16.gmra.mxu0 %v1058
    %v1102 = vpop.f32.mrf.mxu0
    %v1103 = vadd.f32 %v538, %v1102
    %v1104 = vpop.f32.mrf.mxu0
    %v1105 = vpop.f32.mrf.mxu0
    %v1106 = vadd.f32 %v539, %v1105
    %v1107 = vpop.f32.mrf.mxu0
    %1108 = vdwg.mxu0
    %vm1109 = vcmask 261120
    %v1110 = vsel %vm1109, %v598, -inf
    %1111 = vmax.xlane.f32.xlu0 %v1110
    %v1112 = vpop.xlane.xlu0 %1111
    %v1113 = vsel %vm1109, %v601, -inf
    %1114 = vmax.xlane.f32.xlu0 %v1113
    %v1115 = vpop.xlane.xlu0 %1114
    %v1116 = vsel %vm1109, %v606, -inf
    %1117 = vmax.xlane.f32.xlu0 %v1116
    %v1118 = vpop.xlane.xlu0 %1117
    %v1119 = vsel %vm1109, %v609, -inf
    %1120 = vmax.xlane.f32.xlu0 %v1119
    %v1121 = vpop.xlane.xlu0 %1120
    %v1122 = vsel %vm1109, %v669, -inf
    %1123 = vmax.xlane.f32.xlu0 %v1122
    %v1124 = vpop.xlane.xlu0 %1123
    %v1125 = vsel %vm1109, %v672, -inf
    %1126 = vmax.xlane.f32.xlu0 %v1125
    %v1127 = vpop.xlane.xlu0 %1126
    %v1128 = vsel %vm1109, %v677, -inf
    %1129 = vmax.xlane.f32.xlu0 %v1128
    %v1130 = vpop.xlane.xlu0 %1129
    %v1131 = vsel %vm1109, %v680, -inf
    %1132 = vmax.xlane.f32.xlu0 %v1131
    %v1133 = vpop.xlane.xlu0 %1132
    %v1134 = vsel %vm1109, %v740, -inf
    %1135 = vmax.xlane.f32.xlu0 %v1134
    %v1136 = vpop.xlane.xlu0 %1135
    %v1137 = vsel %vm1109, %v743, -inf
    %1138 = vmax.xlane.f32.xlu0 %v1137
    %v1139 = vpop.xlane.xlu0 %1138
    %v1140 = vsel %vm1109, %v748, -inf
    %1141 = vmax.xlane.f32.xlu0 %v1140
    %v1142 = vpop.xlane.xlu0 %1141
    %v1143 = vsel %vm1109, %v751, -inf
    %1144 = vmax.xlane.f32.xlu0 %v1143
    %v1145 = vpop.xlane.xlu0 %1144
    %v1146 = vsel %vm1109, %v811, -inf
    %1147 = vmax.xlane.f32.xlu0 %v1146
    %v1148 = vpop.xlane.xlu0 %1147
    %v1149 = vsel %vm1109, %v814, -inf
    %1150 = vmax.xlane.f32.xlu0 %v1149
    %v1151 = vpop.xlane.xlu0 %1150
    %v1152 = vsel %vm1109, %v819, -inf
    %1153 = vmax.xlane.f32.xlu0 %v1152
    %v1154 = vpop.xlane.xlu0 %1153
    %v1155 = vsel %vm1109, %v822, -inf
    %1156 = vmax.xlane.f32.xlu0 %v1155
    %v1157 = vpop.xlane.xlu0 %1156
    %v1158 = vsel %vm1109, %v882, -inf
    %1159 = vmax.xlane.f32.xlu0 %v1158
    %v1160 = vpop.xlane.xlu0 %1159
    %v1161 = vsel %vm1109, %v885, -inf
    %1162 = vmax.xlane.f32.xlu0 %v1161
    %v1163 = vpop.xlane.xlu0 %1162
    %v1164 = vsel %vm1109, %v890, -inf
    %1165 = vmax.xlane.f32.xlu0 %v1164
    %v1166 = vpop.xlane.xlu0 %1165
    %v1167 = vsel %vm1109, %v893, -inf
    %1168 = vmax.xlane.f32.xlu0 %v1167
    %v1169 = vpop.xlane.xlu0 %1168
    %v1170 = vsel %vm1109, %v953, -inf
    %1171 = vmax.xlane.f32.xlu0 %v1170
    %v1172 = vpop.xlane.xlu0 %1171
    %v1173 = vsel %vm1109, %v956, -inf
    %1174 = vmax.xlane.f32.xlu0 %v1173
    %v1175 = vpop.xlane.xlu0 %1174
    %v1176 = vsel %vm1109, %v961, -inf
    %1177 = vmax.xlane.f32.xlu0 %v1176
    %v1178 = vpop.xlane.xlu0 %1177
    %v1179 = vsel %vm1109, %v964, -inf
    %1180 = vmax.xlane.f32.xlu0 %v1179
    %v1181 = vpop.xlane.xlu0 %1180
    %v1182 = vsel %vm1109, %v1024, -inf
    %1183 = vmax.xlane.f32.xlu0 %v1182
    %v1184 = vpop.xlane.xlu0 %1183
    %v1185 = vsel %vm1109, %v1027, -inf
    %1186 = vmax.xlane.f32.xlu0 %v1185
    %v1187 = vpop.xlane.xlu0 %1186
    %v1188 = vsel %vm1109, %v1032, -inf
    %1189 = vmax.xlane.f32.xlu0 %v1188
    %v1190 = vpop.xlane.xlu0 %1189
    %v1191 = vsel %vm1109, %v1035, -inf
    %1192 = vmax.xlane.f32.xlu0 %v1191
    %v1193 = vpop.xlane.xlu0 %1192
    %v1194 = vsel %vm1109, %v1095, -inf
    %1195 = vmax.xlane.f32.xlu0 %v1194
    %v1196 = vpop.xlane.xlu0 %1195
    %v1197 = vsel %vm1109, %v1098, -inf
    %1198 = vmax.xlane.f32.xlu0 %v1197
    %v1199 = vpop.xlane.xlu0 %1198
    %v1200 = vsel %vm1109, %v1103, -inf
    %1201 = vmax.xlane.f32.xlu0 %v1200
    %v1202 = vpop.xlane.xlu0 %1201
    %v1203 = vsel %vm1109, %v1106, -inf
    %1204 = vmax.xlane.f32.xlu0 %v1203
    %v1205 = vpop.xlane.xlu0 %1204
    %v1206 = vsub.f32 %v598, %v1112
    %v1207 = vsub.f32 %v601, %v1115
    %v1208 = vsub.f32 %v606, %v1118
    %v1209 = vsub.f32 %v609, %v1121
    %v1210 = vsub.f32 %v669, %v1124
    %v1211 = vsub.f32 %v672, %v1127
    %v1212 = vsub.f32 %v677, %v1130
    %v1213 = vsub.f32 %v680, %v1133
    %v1214 = vsub.f32 %v740, %v1136
    %v1215 = vsub.f32 %v743, %v1139
    %v1216 = vsub.f32 %v748, %v1142
    %v1217 = vsub.f32 %v751, %v1145
    %v1218 = vsub.f32 %v811, %v1148
    %v1219 = vsub.f32 %v814, %v1151
    %v1220 = vsub.f32 %v819, %v1154
    %v1221 = vsub.f32 %v822, %v1157
    %v1222 = vsub.f32 %v882, %v1160
    %v1223 = vsub.f32 %v885, %v1163
    %v1224 = vsub.f32 %v890, %v1166
    %v1225 = vsub.f32 %v893, %v1169
    %v1226 = vsub.f32 %v953, %v1172
    %v1227 = vsub.f32 %v956, %v1175
    %v1228 = vsub.f32 %v961, %v1178
    %v1229 = vsub.f32 %v964, %v1181
    %v1230 = vsub.f32 %v1024, %v1184
    %v1231 = vsub.f32 %v1027, %v1187
    %v1232 = vsub.f32 %v1032, %v1190
    %v1233 = vsub.f32 %v1035, %v1193
    %v1234 = vsub.f32 %v1095, %v1196
    %v1235 = vsub.f32 %v1098, %v1199
    %v1236 = vsub.f32 %v1103, %v1202
    %v1237 = vsub.f32 %v1106, %v1205
    %v1238 = vmul.f32 %v1206, 1.442695
    %v1239 = vpow.pop %v1238
    %v1240 = vmul.f32 %v1207, 1.442695
    %v1241 = vpow.pop %v1240
    %v1242 = vmul.f32 %v1208, 1.442695
    %v1243 = vpow.pop %v1242
    %v1244 = vmul.f32 %v1209, 1.442695
    %v1245 = vpow.pop %v1244
    %v1246 = vmul.f32 %v1210, 1.442695
    %v1247 = vpow.pop %v1246
    %v1248 = vmul.f32 %v1211, 1.442695
    %v1249 = vpow.pop %v1248
    %v1250 = vmul.f32 %v1212, 1.442695
    %v1251 = vpow.pop %v1250
    %v1252 = vmul.f32 %v1213, 1.442695
    %v1253 = vpow.pop %v1252
    %v1254 = vmul.f32 %v1214, 1.442695
    %v1255 = vpow.pop %v1254
    %v1256 = vmul.f32 %v1215, 1.442695
    %v1257 = vpow.pop %v1256
    %v1258 = vmul.f32 %v1216, 1.442695
    %v1259 = vpow.pop %v1258
    %v1260 = vmul.f32 %v1217, 1.442695
    %v1261 = vpow.pop %v1260
    %v1262 = vmul.f32 %v1218, 1.442695
    %v1263 = vpow.pop %v1262
    %v1264 = vmul.f32 %v1219, 1.442695
    %v1265 = vpow.pop %v1264
    %v1266 = vmul.f32 %v1220, 1.442695
    %v1267 = vpow.pop %v1266
    %v1268 = vmul.f32 %v1221, 1.442695
    %v1269 = vpow.pop %v1268
    %v1270 = vmul.f32 %v1222, 1.442695
    %v1271 = vpow.pop %v1270
    %v1272 = vmul.f32 %v1223, 1.442695
    %v1273 = vpow.pop %v1272
    %v1274 = vmul.f32 %v1224, 1.442695
    %v1275 = vpow.pop %v1274
    %v1276 = vmul.f32 %v1225, 1.442695
    %v1277 = vpow.pop %v1276
    %v1278 = vmul.f32 %v1226, 1.442695
    %v1279 = vpow.pop %v1278
    %v1280 = vmul.f32 %v1227, 1.442695
    %v1281 = vpow.pop %v1280
    %v1282 = vmul.f32 %v1228, 1.442695
    %v1283 = vpow.pop %v1282
    %v1284 = vmul.f32 %v1229, 1.442695
    %v1285 = vpow.pop %v1284
    %v1286 = vmul.f32 %v1230, 1.442695
    %v1287 = vpow.pop %v1286
    %v1288 = vmul.f32 %v1231, 1.442695
    %v1289 = vpow.pop %v1288
    %v1290 = vmul.f32 %v1232, 1.442695
    %v1291 = vpow.pop %v1290
    %v1292 = vmul.f32 %v1233, 1.442695
    %v1293 = vpow.pop %v1292
    %v1294 = vmul.f32 %v1234, 1.442695
    %v1295 = vpow.pop %v1294
    %v1296 = vmul.f32 %v1235, 1.442695
    %v1297 = vpow.pop %v1296
    %v1298 = vmul.f32 %v1236, 1.442695
    %v1299 = vpow.pop %v1298
    %v1300 = vmul.f32 %v1237, 1.442695
    %v1301 = vpow.pop %v1300
    %v1302 = vsel %vm1109, %v1239, 0.0
    %1303 = vadd.xlane.f32.xlu0 %v1302
    %v1304 = vpop.xlane.xlu0 %1303
    %v1305 = vsel %vm1109, %v1241, 0.0
    %1306 = vadd.xlane.f32.xlu0 %v1305
    %v1307 = vpop.xlane.xlu0 %1306
    %v1308 = vsel %vm1109, %v1243, 0.0
    %1309 = vadd.xlane.f32.xlu0 %v1308
    %v1310 = vpop.xlane.xlu0 %1309
    %v1311 = vsel %vm1109, %v1245, 0.0
    %1312 = vadd.xlane.f32.xlu0 %v1311
    %v1313 = vpop.xlane.xlu0 %1312
    %v1314 = vsel %vm1109, %v1247, 0.0
    %1315 = vadd.xlane.f32.xlu0 %v1314
    %v1316 = vpop.xlane.xlu0 %1315
    %v1317 = vsel %vm1109, %v1249, 0.0
    %1318 = vadd.xlane.f32.xlu0 %v1317
    %v1319 = vpop.xlane.xlu0 %1318
    %v1320 = vsel %vm1109, %v1251, 0.0
    %1321 = vadd.xlane.f32.xlu0 %v1320
    %v1322 = vpop.xlane.xlu0 %1321
    %v1323 = vsel %vm1109, %v1253, 0.0
    %1324 = vadd.xlane.f32.xlu0 %v1323
    %v1325 = vpop.xlane.xlu0 %1324
    %v1326 = vsel %vm1109, %v1255, 0.0
    %1327 = vadd.xlane.f32.xlu0 %v1326
    %v1328 = vpop.xlane.xlu0 %1327
    %v1329 = vsel %vm1109, %v1257, 0.0
    %1330 = vadd.xlane.f32.xlu0 %v1329
    %v1331 = vpop.xlane.xlu0 %1330
    %v1332 = vsel %vm1109, %v1259, 0.0
    %1333 = vadd.xlane.f32.xlu0 %v1332
    %v1334 = vpop.xlane.xlu0 %1333
    %v1335 = vsel %vm1109, %v1261, 0.0
    %1336 = vadd.xlane.f32.xlu0 %v1335
    %v1337 = vpop.xlane.xlu0 %1336
    %v1338 = vsel %vm1109, %v1263, 0.0
    %1339 = vadd.xlane.f32.xlu0 %v1338
    %v1340 = vpop.xlane.xlu0 %1339
    %v1341 = vsel %vm1109, %v1265, 0.0
    %1342 = vadd.xlane.f32.xlu0 %v1341
    %v1343 = vpop.xlane.xlu0 %1342
    %v1344 = vsel %vm1109, %v1267, 0.0
    %1345 = vadd.xlane.f32.xlu0 %v1344
    %v1346 = vpop.xlane.xlu0 %1345
    %v1347 = vsel %vm1109, %v1269, 0.0
    %1348 = vadd.xlane.f32.xlu0 %v1347
    %v1349 = vpop.xlane.xlu0 %1348
    %v1350 = vsel %vm1109, %v1271, 0.0
    %1351 = vadd.xlane.f32.xlu0 %v1350
    %v1352 = vpop.xlane.xlu0 %1351
    %v1353 = vsel %vm1109, %v1273, 0.0
    %1354 = vadd.xlane.f32.xlu0 %v1353
    %v1355 = vpop.xlane.xlu0 %1354
    %v1356 = vsel %vm1109, %v1275, 0.0
    %1357 = vadd.xlane.f32.xlu0 %v1356
    %v1358 = vpop.xlane.xlu0 %1357
    %v1359 = vsel %vm1109, %v1277, 0.0
    %1360 = vadd.xlane.f32.xlu0 %v1359
    %v1361 = vpop.xlane.xlu0 %1360
    %v1362 = vsel %vm1109, %v1279, 0.0
    %1363 = vadd.xlane.f32.xlu0 %v1362
    %v1364 = vpop.xlane.xlu0 %1363
    %v1365 = vsel %vm1109, %v1281, 0.0
    %1366 = vadd.xlane.f32.xlu0 %v1365
    %v1367 = vpop.xlane.xlu0 %1366
    %v1368 = vsel %vm1109, %v1283, 0.0
    %1369 = vadd.xlane.f32.xlu0 %v1368
    %v1370 = vpop.xlane.xlu0 %1369
    %v1371 = vsel %vm1109, %v1285, 0.0
    %1372 = vadd.xlane.f32.xlu0 %v1371
    %v1373 = vpop.xlane.xlu0 %1372
    %v1374 = vsel %vm1109, %v1287, 0.0
    %1375 = vadd.xlane.f32.xlu0 %v1374
    %v1376 = vpop.xlane.xlu0 %1375
    %v1377 = vsel %vm1109, %v1289, 0.0
    %1378 = vadd.xlane.f32.xlu0 %v1377
    %v1379 = vpop.xlane.xlu0 %1378
    %v1380 = vsel %vm1109, %v1291, 0.0
    %1381 = vadd.xlane.f32.xlu0 %v1380
    %v1382 = vpop.xlane.xlu0 %1381
    %v1383 = vsel %vm1109, %v1293, 0.0
    %1384 = vadd.xlane.f32.xlu0 %v1383
    %v1385 = vpop.xlane.xlu0 %1384
    %v1386 = vsel %vm1109, %v1295, 0.0
    %1387 = vadd.xlane.f32.xlu0 %v1386
    %v1388 = vpop.xlane.xlu0 %1387
    %v1389 = vsel %vm1109, %v1297, 0.0
    %1390 = vadd.xlane.f32.xlu0 %v1389
    %v1391 = vpop.xlane.xlu0 %1390
    %v1392 = vsel %vm1109, %v1299, 0.0
    %1393 = vadd.xlane.f32.xlu0 %v1392
    %v1394 = vpop.xlane.xlu0 %1393
    %v1395 = vsel %vm1109, %v1301, 0.0
    %1396 = vadd.xlane.f32.xlu0 %v1395
    %v1397 = vpop.xlane.xlu0 %1396
    %v1398 = vrcp.pop %v1304
    %v1399 = vmul.f32 %v1239, %v1398
    %v1400 = vrcp.pop %v1307
    %v1401 = vmul.f32 %v1241, %v1400
    %v1402 = vrcp.pop %v1310
    %v1403 = vmul.f32 %v1243, %v1402
    %v1404 = vrcp.pop %v1313
    %v1405 = vmul.f32 %v1245, %v1404
    %v1406 = vrcp.pop %v1316
    %v1407 = vmul.f32 %v1247, %v1406
    %v1408 = vrcp.pop %v1319
    %v1409 = vmul.f32 %v1249, %v1408
    %v1410 = vrcp.pop %v1322
    %v1411 = vmul.f32 %v1251, %v1410
    %v1412 = vrcp.pop %v1325
    %v1413 = vmul.f32 %v1253, %v1412
    %v1414 = vrcp.pop %v1328
    %v1415 = vmul.f32 %v1255, %v1414
    %v1416 = vrcp.pop %v1331
    %v1417 = vmul.f32 %v1257, %v1416
    %v1418 = vrcp.pop %v1334
    %v1419 = vmul.f32 %v1259, %v1418
    %v1420 = vrcp.pop %v1337
    %v1421 = vmul.f32 %v1261, %v1420
    %v1422 = vrcp.pop %v1340
    %v1423 = vmul.f32 %v1263, %v1422
    %v1424 = vrcp.pop %v1343
    %v1425 = vmul.f32 %v1265, %v1424
    %v1426 = vrcp.pop %v1346
    %v1427 = vmul.f32 %v1267, %v1426
    %v1428 = vrcp.pop %v1349
    %v1429 = vmul.f32 %v1269, %v1428
    %v1430 = vrcp.pop %v1352
    %v1431 = vmul.f32 %v1271, %v1430
    %v1432 = vrcp.pop %v1355
    %v1433 = vmul.f32 %v1273, %v1432
    %v1434 = vrcp.pop %v1358
    %v1435 = vmul.f32 %v1275, %v1434
    %v1436 = vrcp.pop %v1361
    %v1437 = vmul.f32 %v1277, %v1436
    %v1438 = vrcp.pop %v1364
    %v1439 = vmul.f32 %v1279, %v1438
    %v1440 = vrcp.pop %v1367
    %v1441 = vmul.f32 %v1281, %v1440
    %v1442 = vrcp.pop %v1370
    %v1443 = vmul.f32 %v1283, %v1442
    %v1444 = vrcp.pop %v1373
    %v1445 = vmul.f32 %v1285, %v1444
    %v1446 = vrcp.pop %v1376
    %v1447 = vmul.f32 %v1287, %v1446
    %v1448 = vrcp.pop %v1379
    %v1449 = vmul.f32 %v1289, %v1448
    %v1450 = vrcp.pop %v1382
    %v1451 = vmul.f32 %v1291, %v1450
    %v1452 = vrcp.pop %v1385
    %v1453 = vmul.f32 %v1293, %v1452
    %v1454 = vrcp.pop %v1388
    %v1455 = vmul.f32 %v1295, %v1454
    %v1456 = vrcp.pop %v1391
    %v1457 = vmul.f32 %v1297, %v1456
    %v1458 = vrcp.pop %v1394
    %v1459 = vmul.f32 %v1299, %v1458
    %v1460 = vrcp.pop %v1397
    %v1461 = vmul.f32 %v1301, %v1460
    %v1462 = vpack.c.bf16 %v1401, %v1399
    %v1463 = vpack.c.bf16 %v1405, %v1403
    %v1464 = vpack.c.bf16 %v1409, %v1407
    %v1465 = vpack.c.bf16 %v1413, %v1411
    %v1466 = vpack.c.bf16 %v1417, %v1415
    %v1467 = vpack.c.bf16 %v1421, %v1419
    %v1468 = vpack.c.bf16 %v1425, %v1423
    %v1469 = vpack.c.bf16 %v1429, %v1427
    %v1470 = vpack.c.bf16 %v1433, %v1431
    %v1471 = vpack.c.bf16 %v1437, %v1435
    %v1472 = vpack.c.bf16 %v1441, %v1439
    %v1473 = vpack.c.bf16 %v1445, %v1443
    %v1474 = vpack.c.bf16 %v1449, %v1447
    %v1475 = vpack.c.bf16 %v1453, %v1451
    %v1476 = vpack.c.bf16 %v1457, %v1455
    %v1477 = vpack.c.bf16 %v1461, %v1459
    %v1479 = vsel %vm1109, %v528, 0
    %v1482 = vsel %vm1109, %v1462, 0
    %v1485 = vsel %vm1109, %v1463, 0
    %1487 = vmatprep.subr.bf16.mxu0 0
    %1488 = vmatpush1.bf16.xpose.msra.mxu0 0
    %1489 = vmatprep.subr.bf16.mxu0 0
    %1490 = vmatpush1.bf16.xpose.msra.mxu0 0
    %1491 = vmatprep.subr.bf16.mxu0 0
    %1492 = vmatpush1.bf16.xpose.msra.mxu0 0
    %1493 = vmatprep.subr.bf16.mxu0 0
    %1494 = vmatpush1.bf16.xpose.msra.mxu0 0
    %1495 = vmatprep.subr.bf16.mxu0 0
    %1496 = vmatpush1.bf16.xpose.msra.mxu0 0
    %1497 = vmatprep.subr.bf16.mxu0 0
    %1498 = vmatpush1.bf16.xpose.msra.mxu0 0
    %1499 = vmatprep.subr.bf16.mxu0 0
    %1500 = vmatpush1.bf16.xpose.msra.mxu0 %v1485
    %1501 = vmatprep.subr.bf16.mxu0 0
    %1502 = vmatpush1.bf16.xpose.msra.mxu0 %v1482
    %1503 = vmatprep.subr.bf16.mxu0 0
    %1504 = vmatpush2.bf16.xpose.msra.mxu0 0
    %1505 = vmatprep.subr.bf16.mxu0 0
    %1506 = vmatpush2.bf16.xpose.msra.mxu0 0
    %1507 = vmatprep.subr.bf16.mxu0 0
    %1508 = vmatpush2.bf16.xpose.msra.mxu0 0
    %1509 = vmatprep.subr.bf16.mxu0 0
    %1510 = vmatpush2.bf16.xpose.msra.mxu0 0
    %1511 = vmatprep.subr.bf16.mxu0 0
    %1512 = vmatpush2.bf16.xpose.msra.mxu0 0
    %1513 = vmatprep.subr.bf16.mxu0 0
    %1514 = vmatpush2.bf16.xpose.msra.mxu0 0
    %1515 = vmatprep.subr.bf16.mxu0 0
    %1516 = vmatpush2.bf16.xpose.msra.mxu0 0
    %1517 = vmatprep.subr.bf16.mxu0 0
    %1518 = vmatpush2.bf16.xpose.msra.mxu0 0
    %1519 = vmatprep.mubr.bf16.mxu0 0
    %1520 = vmatmul.mubr.bf16.gmra.mxu0 %v1479
    %v1521 = vpop.f32.mrf.mxu0
    %v1522 = vadd.f32 0.0, %v1521
    %v1523 = vpop.f32.mrf.mxu0
    %v1524 = vpop.f32.mrf.mxu0
    %v1525 = vadd.f32 0.0, %v1524
    %v1526 = vpop.f32.mrf.mxu0
    %1527 = vdwg.mxu0
    %v1529 = vsel %vm1109, %v529, 0
    %v1532 = vsel %vm1109, %v1464, 0
    %v1535 = vsel %vm1109, %v1465, 0
    %1537 = vmatprep.subr.bf16.mxu0 0
    %1538 = vmatpush1.bf16.xpose.msra.mxu0 0
    %1539 = vmatprep.subr.bf16.mxu0 0
    %1540 = vmatpush1.bf16.xpose.msra.mxu0 0
    %1541 = vmatprep.subr.bf16.mxu0 0
    %1542 = vmatpush1.bf16.xpose.msra.mxu0 0
    %1543 = vmatprep.subr.bf16.mxu0 0
    %1544 = vmatpush1.bf16.xpose.msra.mxu0 0
    %1545 = vmatprep.subr.bf16.mxu0 0
    %1546 = vmatpush1.bf16.xpose.msra.mxu0 0
    %1547 = vmatprep.subr.bf16.mxu0 0
    %1548 = vmatpush1.bf16.xpose.msra.mxu0 0
    %1549 = vmatprep.subr.bf16.mxu0 0
    %1550 = vmatpush1.bf16.xpose.msra.mxu0 %v1535
    %1551 = vmatprep.subr.bf16.mxu0 0
    %1552 = vmatpush1.bf16.xpose.msra.mxu0 %v1532
    %1553 = vmatprep.subr.bf16.mxu0 0
    %1554 = vmatpush2.bf16.xpose.msra.mxu0 0
    %1555 = vmatprep.subr.bf16.mxu0 0
    %1556 = vmatpush2.bf16.xpose.msra.mxu0 0
    %1557 = vmatprep.subr.bf16.mxu0 0
    %1558 = vmatpush2.bf16.xpose.msra.mxu0 0
    %1559 = vmatprep.subr.bf16.mxu0 0
    %1560 = vmatpush2.bf16.xpose.msra.mxu0 0
    %1561 = vmatprep.subr.bf16.mxu0 0
    %1562 = vmatpush2.bf16.xpose.msra.mxu0 0
    %1563 = vmatprep.subr.bf16.mxu0 0
    %1564 = vmatpush2.bf16.xpose.msra.mxu0 0
    %1565 = vmatprep.subr.bf16.mxu0 0
    %1566 = vmatpush2.bf16.xpose.msra.mxu0 0
    %1567 = vmatprep.subr.bf16.mxu0 0
    %1568 = vmatpush2.bf16.xpose.msra.mxu0 0
    %1569 = vmatprep.mubr.bf16.mxu0 0
    %1570 = vmatmul.mubr.bf16.gmra.mxu0 %v1529
    %v1571 = vpop.f32.mrf.mxu0
    %v1572 = vadd.f32 0.0, %v1571
    %v1573 = vpop.f32.mrf.mxu0
    %v1574 = vpop.f32.mrf.mxu0
    %v1575 = vadd.f32 0.0, %v1574
    %v1576 = vpop.f32.mrf.mxu0
    %1577 = vdwg.mxu0
    %v1579 = vsel %vm1109, %v530, 0
    %v1582 = vsel %vm1109, %v1466, 0
    %v1585 = vsel %vm1109, %v1467, 0
    %1587 = vmatprep.subr.bf16.mxu0 0
    %1588 = vmatpush1.bf16.xpose.msra.mxu0 0
    %1589 = vmatprep.subr.bf16.mxu0 0
    %1590 = vmatpush1.bf16.xpose.msra.mxu0 0
    %1591 = vmatprep.subr.bf16.mxu0 0
    %1592 = vmatpush1.bf16.xpose.msra.mxu0 0
    %1593 = vmatprep.subr.bf16.mxu0 0
    %1594 = vmatpush1.bf16.xpose.msra.mxu0 0
    %1595 = vmatprep.subr.bf16.mxu0 0
    %1596 = vmatpush1.bf16.xpose.msra.mxu0 0
    %1597 = vmatprep.subr.bf16.mxu0 0
    %1598 = vmatpush1.bf16.xpose.msra.mxu0 0
    %1599 = vmatprep.subr.bf16.mxu0 0
    %1600 = vmatpush1.bf16.xpose.msra.mxu0 %v1585
    %1601 = vmatprep.subr.bf16.mxu0 0
    %1602 = vmatpush1.bf16.xpose.msra.mxu0 %v1582
    %1603 = vmatprep.subr.bf16.mxu0 0
    %1604 = vmatpush2.bf16.xpose.msra.mxu0 0
    %1605 = vmatprep.subr.bf16.mxu0 0
    %1606 = vmatpush2.bf16.xpose.msra.mxu0 0
    %1607 = vmatprep.subr.bf16.mxu0 0
    %1608 = vmatpush2.bf16.xpose.msra.mxu0 0
    %1609 = vmatprep.subr.bf16.mxu0 0
    %1610 = vmatpush2.bf16.xpose.msra.mxu0 0
    %1611 = vmatprep.subr.bf16.mxu0 0
    %1612 = vmatpush2.bf16.xpose.msra.mxu0 0
    %1613 = vmatprep.subr.bf16.mxu0 0
    %1614 = vmatpush2.bf16.xpose.msra.mxu0 0
    %1615 = vmatprep.subr.bf16.mxu0 0
    %1616 = vmatpush2.bf16.xpose.msra.mxu0 0
    %1617 = vmatprep.subr.bf16.mxu0 0
    %1618 = vmatpush2.bf16.xpose.msra.mxu0 0
    %1619 = vmatprep.mubr.bf16.mxu0 0
    %1620 = vmatmul.mubr.bf16.gmra.mxu0 %v1579
    %v1621 = vpop.f32.mrf.mxu0
    %v1622 = vadd.f32 0.0, %v1621
    %v1623 = vpop.f32.mrf.mxu0
    %v1624 = vpop.f32.mrf.mxu0
    %v1625 = vadd.f32 0.0, %v1624
    %v1626 = vpop.f32.mrf.mxu0
    %1627 = vdwg.mxu0
    %v1629 = vsel %vm1109, %v531, 0
    %v1632 = vsel %vm1109, %v1468, 0
    %v1635 = vsel %vm1109, %v1469, 0
    %1637 = vmatprep.subr.bf16.mxu0 0
    %1638 = vmatpush1.bf16.xpose.msra.mxu0 0
    %1639 = vmatprep.subr.bf16.mxu0 0
    %1640 = vmatpush1.bf16.xpose.msra.mxu0 0
    %1641 = vmatprep.subr.bf16.mxu0 0
    %1642 = vmatpush1.bf16.xpose.msra.mxu0 0
    %1643 = vmatprep.subr.bf16.mxu0 0
    %1644 = vmatpush1.bf16.xpose.msra.mxu0 0
    %1645 = vmatprep.subr.bf16.mxu0 0
    %1646 = vmatpush1.bf16.xpose.msra.mxu0 0
    %1647 = vmatprep.subr.bf16.mxu0 0
    %1648 = vmatpush1.bf16.xpose.msra.mxu0 0
    %1649 = vmatprep.subr.bf16.mxu0 0
    %1650 = vmatpush1.bf16.xpose.msra.mxu0 %v1635
    %1651 = vmatprep.subr.bf16.mxu0 0
    %1652 = vmatpush1.bf16.xpose.msra.mxu0 %v1632
    %1653 = vmatprep.subr.bf16.mxu0 0
    %1654 = vmatpush2.bf16.xpose.msra.mxu0 0
    %1655 = vmatprep.subr.bf16.mxu0 0
    %1656 = vmatpush2.bf16.xpose.msra.mxu0 0
    %1657 = vmatprep.subr.bf16.mxu0 0
    %1658 = vmatpush2.bf16.xpose.msra.mxu0 0
    %1659 = vmatprep.subr.bf16.mxu0 0
    %1660 = vmatpush2.bf16.xpose.msra.mxu0 0
    %1661 = vmatprep.subr.bf16.mxu0 0
    %1662 = vmatpush2.bf16.xpose.msra.mxu0 0
    %1663 = vmatprep.subr.bf16.mxu0 0
    %1664 = vmatpush2.bf16.xpose.msra.mxu0 0
    %1665 = vmatprep.subr.bf16.mxu0 0
    %1666 = vmatpush2.bf16.xpose.msra.mxu0 0
    %1667 = vmatprep.subr.bf16.mxu0 0
    %1668 = vmatpush2.bf16.xpose.msra.mxu0 0
    %1669 = vmatprep.mubr.bf16.mxu0 0
    %1670 = vmatmul.mubr.bf16.gmra.mxu0 %v1629
    %v1671 = vpop.f32.mrf.mxu0
    %v1672 = vadd.f32 0.0, %v1671
    %v1673 = vpop.f32.mrf.mxu0
    %v1674 = vpop.f32.mrf.mxu0
    %v1675 = vadd.f32 0.0, %v1674
    %v1676 = vpop.f32.mrf.mxu0
    %1677 = vdwg.mxu0
    %v1679 = vsel %vm1109, %v532, 0
    %v1682 = vsel %vm1109, %v1470, 0
    %v1685 = vsel %vm1109, %v1471, 0
    %1687 = vmatprep.subr.bf16.mxu0 0
    %1688 = vmatpush1.bf16.xpose.msra.mxu0 0
    %1689 = vmatprep.subr.bf16.mxu0 0
    %1690 = vmatpush1.bf16.xpose.msra.mxu0 0
    %1691 = vmatprep.subr.bf16.mxu0 0
    %1692 = vmatpush1.bf16.xpose.msra.mxu0 0
    %1693 = vmatprep.subr.bf16.mxu0 0
    %1694 = vmatpush1.bf16.xpose.msra.mxu0 0
    %1695 = vmatprep.subr.bf16.mxu0 0
    %1696 = vmatpush1.bf16.xpose.msra.mxu0 0
    %1697 = vmatprep.subr.bf16.mxu0 0
    %1698 = vmatpush1.bf16.xpose.msra.mxu0 0
    %1699 = vmatprep.subr.bf16.mxu0 0
    %1700 = vmatpush1.bf16.xpose.msra.mxu0 %v1685
    %1701 = vmatprep.subr.bf16.mxu0 0
    %1702 = vmatpush1.bf16.xpose.msra.mxu0 %v1682
    %1703 = vmatprep.subr.bf16.mxu0 0
    %1704 = vmatpush2.bf16.xpose.msra.mxu0 0
    %1705 = vmatprep.subr.bf16.mxu0 0
    %1706 = vmatpush2.bf16.xpose.msra.mxu0 0
    %1707 = vmatprep.subr.bf16.mxu0 0
    %1708 = vmatpush2.bf16.xpose.msra.mxu0 0
    %1709 = vmatprep.subr.bf16.mxu0 0
    %1710 = vmatpush2.bf16.xpose.msra.mxu0 0
    %1711 = vmatprep.subr.bf16.mxu0 0
    %1712 = vmatpush2.bf16.xpose.msra.mxu0 0
    %1713 = vmatprep.subr.bf16.mxu0 0
    %1714 = vmatpush2.bf16.xpose.msra.mxu0 0
    %1715 = vmatprep.subr.bf16.mxu0 0
    %1716 = vmatpush2.bf16.xpose.msra.mxu0 0
    %1717 = vmatprep.subr.bf16.mxu0 0
    %1718 = vmatpush2.bf16.xpose.msra.mxu0 0
    %1719 = vmatprep.mubr.bf16.mxu0 0
    %1720 = vmatmul.mubr.bf16.gmra.mxu0 %v1679
    %v1721 = vpop.f32.mrf.mxu0
    %v1722 = vadd.f32 0.0, %v1721
    %v1723 = vpop.f32.mrf.mxu0
    %v1724 = vpop.f32.mrf.mxu0
    %v1725 = vadd.f32 0.0, %v1724
    %v1726 = vpop.f32.mrf.mxu0
    %1727 = vdwg.mxu0
    %v1729 = vsel %vm1109, %v533, 0
    %v1732 = vsel %vm1109, %v1472, 0
    %v1735 = vsel %vm1109, %v1473, 0
    %1737 = vmatprep.subr.bf16.mxu0 0
    %1738 = vmatpush1.bf16.xpose.msra.mxu0 0
    %1739 = vmatprep.subr.bf16.mxu0 0
    %1740 = vmatpush1.bf16.xpose.msra.mxu0 0
    %1741 = vmatprep.subr.bf16.mxu0 0
    %1742 = vmatpush1.bf16.xpose.msra.mxu0 0
    %1743 = vmatprep.subr.bf16.mxu0 0
    %1744 = vmatpush1.bf16.xpose.msra.mxu0 0
    %1745 = vmatprep.subr.bf16.mxu0 0
    %1746 = vmatpush1.bf16.xpose.msra.mxu0 0
    %1747 = vmatprep.subr.bf16.mxu0 0
    %1748 = vmatpush1.bf16.xpose.msra.mxu0 0
    %1749 = vmatprep.subr.bf16.mxu0 0
    %1750 = vmatpush1.bf16.xpose.msra.mxu0 %v1735
    %1751 = vmatprep.subr.bf16.mxu0 0
    %1752 = vmatpush1.bf16.xpose.msra.mxu0 %v1732
    %1753 = vmatprep.subr.bf16.mxu0 0
    %1754 = vmatpush2.bf16.xpose.msra.mxu0 0
    %1755 = vmatprep.subr.bf16.mxu0 0
    %1756 = vmatpush2.bf16.xpose.msra.mxu0 0
    %1757 = vmatprep.subr.bf16.mxu0 0
    %1758 = vmatpush2.bf16.xpose.msra.mxu0 0
    %1759 = vmatprep.subr.bf16.mxu0 0
    %1760 = vmatpush2.bf16.xpose.msra.mxu0 0
    %1761 = vmatprep.subr.bf16.mxu0 0
    %1762 = vmatpush2.bf16.xpose.msra.mxu0 0
    %1763 = vmatprep.subr.bf16.mxu0 0
    %1764 = vmatpush2.bf16.xpose.msra.mxu0 0
    %1765 = vmatprep.subr.bf16.mxu0 0
    %1766 = vmatpush2.bf16.xpose.msra.mxu0 0
    %1767 = vmatprep.subr.bf16.mxu0 0
    %1768 = vmatpush2.bf16.xpose.msra.mxu0 0
    %1769 = vmatprep.mubr.bf16.mxu0 0
    %1770 = vmatmul.mubr.bf16.gmra.mxu0 %v1729
    %v1771 = vpop.f32.mrf.mxu0
    %v1772 = vadd.f32 0.0, %v1771
    %v1773 = vpop.f32.mrf.mxu0
    %v1774 = vpop.f32.mrf.mxu0
    %v1775 = vadd.f32 0.0, %v1774
    %v1776 = vpop.f32.mrf.mxu0
    %1777 = vdwg.mxu0
    %v1779 = vsel %vm1109, %v534, 0
    %v1782 = vsel %vm1109, %v1474, 0
    %v1785 = vsel %vm1109, %v1475, 0
    %1787 = vmatprep.subr.bf16.mxu0 0
    %1788 = vmatpush1.bf16.xpose.msra.mxu0 0
    %1789 = vmatprep.subr.bf16.mxu0 0
    %1790 = vmatpush1.bf16.xpose.msra.mxu0 0
    %1791 = vmatprep.subr.bf16.mxu0 0
    %1792 = vmatpush1.bf16.xpose.msra.mxu0 0
    %1793 = vmatprep.subr.bf16.mxu0 0
    %1794 = vmatpush1.bf16.xpose.msra.mxu0 0
    %1795 = vmatprep.subr.bf16.mxu0 0
    %1796 = vmatpush1.bf16.xpose.msra.mxu0 0
    %1797 = vmatprep.subr.bf16.mxu0 0
    %1798 = vmatpush1.bf16.xpose.msra.mxu0 0
    %1799 = vmatprep.subr.bf16.mxu0 0
    %1800 = vmatpush1.bf16.xpose.msra.mxu0 %v1785
    %1801 = vmatprep.subr.bf16.mxu0 0
    %1802 = vmatpush1.bf16.xpose.msra.mxu0 %v1782
    %1803 = vmatprep.subr.bf16.mxu0 0
    %1804 = vmatpush2.bf16.xpose.msra.mxu0 0
    %1805 = vmatprep.subr.bf16.mxu0 0
    %1806 = vmatpush2.bf16.xpose.msra.mxu0 0
    %1807 = vmatprep.subr.bf16.mxu0 0
    %1808 = vmatpush2.bf16.xpose.msra.mxu0 0
    %1809 = vmatprep.subr.bf16.mxu0 0
    %1810 = vmatpush2.bf16.xpose.msra.mxu0 0
    %1811 = vmatprep.subr.bf16.mxu0 0
    %1812 = vmatpush2.bf16.xpose.msra.mxu0 0
    %1813 = vmatprep.subr.bf16.mxu0 0
    %1814 = vmatpush2.bf16.xpose.msra.mxu0 0
    %1815 = vmatprep.subr.bf16.mxu0 0
    %1816 = vmatpush2.bf16.xpose.msra.mxu0 0
    %1817 = vmatprep.subr.bf16.mxu0 0
    %1818 = vmatpush2.bf16.xpose.msra.mxu0 0
    %1819 = vmatprep.mubr.bf16.mxu0 0
    %1820 = vmatmul.mubr.bf16.gmra.mxu0 %v1779
    %v1821 = vpop.f32.mrf.mxu0
    %v1822 = vadd.f32 0.0, %v1821
    %v1823 = vpop.f32.mrf.mxu0
    %v1824 = vpop.f32.mrf.mxu0
    %v1825 = vadd.f32 0.0, %v1824
    %v1826 = vpop.f32.mrf.mxu0
    %1827 = vdwg.mxu0
    %v1829 = vsel %vm1109, %v535, 0
    %v1832 = vsel %vm1109, %v1476, 0
    %v1835 = vsel %vm1109, %v1477, 0
    %1837 = vmatprep.subr.bf16.mxu0 0
    %1838 = vmatpush1.bf16.xpose.msra.mxu0 0
    %1839 = vmatprep.subr.bf16.mxu0 0
    %1840 = vmatpush1.bf16.xpose.msra.mxu0 0
    %1841 = vmatprep.subr.bf16.mxu0 0
    %1842 = vmatpush1.bf16.xpose.msra.mxu0 0
    %1843 = vmatprep.subr.bf16.mxu0 0
    %1844 = vmatpush1.bf16.xpose.msra.mxu0 0
    %1845 = vmatprep.subr.bf16.mxu0 0
    %1846 = vmatpush1.bf16.xpose.msra.mxu0 0
    %1847 = vmatprep.subr.bf16.mxu0 0
    %1848 = vmatpush1.bf16.xpose.msra.mxu0 0
    %1849 = vmatprep.subr.bf16.mxu0 0
    %1850 = vmatpush1.bf16.xpose.msra.mxu0 %v1835
    %1851 = vmatprep.subr.bf16.mxu0 0
    %1852 = vmatpush1.bf16.xpose.msra.mxu0 %v1832
    %1853 = vmatprep.subr.bf16.mxu0 0
    %1854 = vmatpush2.bf16.xpose.msra.mxu0 0
    %1855 = vmatprep.subr.bf16.mxu0 0
    %1856 = vmatpush2.bf16.xpose.msra.mxu0 0
    %1857 = vmatprep.subr.bf16.mxu0 0
    %1858 = vmatpush2.bf16.xpose.msra.mxu0 0
    %1859 = vmatprep.subr.bf16.mxu0 0
    %1860 = vmatpush2.bf16.xpose.msra.mxu0 0
    %1861 = vmatprep.subr.bf16.mxu0 0
    %1862 = vmatpush2.bf16.xpose.msra.mxu0 0
    %1863 = vmatprep.subr.bf16.mxu0 0
    %1864 = vmatpush2.bf16.xpose.msra.mxu0 0
    %1865 = vmatprep.subr.bf16.mxu0 0
    %1866 = vmatpush2.bf16.xpose.msra.mxu0 0
    %1867 = vmatprep.subr.bf16.mxu0 0
    %1868 = vmatpush2.bf16.xpose.msra.mxu0 0
    %1869 = vmatprep.mubr.bf16.mxu0 0
    %1870 = vmatmul.mubr.bf16.gmra.mxu0 %v1829
    %v1871 = vpop.f32.mrf.mxu0
    %v1872 = vadd.f32 0.0, %v1871
    %v1873 = vpop.f32.mrf.mxu0
    %v1874 = vpop.f32.mrf.mxu0
    %v1875 = vadd.f32 0.0, %v1874
    %v1876 = vpop.f32.mrf.mxu0
    %1877 = vdwg.mxu0
    %1878 = vxpose.xlu0.b32.start [1/16] %v1522, 128
    %1879 = vxpose.xlu0.b32.cont [2/16] %v1525, 128
    %1880 = vxpose.xlu0.b32.cont [3/16] %v1572, 128
    %1881 = vxpose.xlu0.b32.cont [4/16] %v1575, 128
    %1882 = vxpose.xlu0.b32.cont [5/16] %v1622, 128
    %1883 = vxpose.xlu0.b32.cont [6/16] %v1625, 128
    %1884 = vxpose.xlu0.b32.cont [7/16] %v1672, 128
    %1885 = vxpose.xlu0.b32.cont [8/16] %v1675, 128
    %1886 = vxpose.xlu0.b32.cont [9/16] %v1722, 128
    %1887 = vxpose.xlu0.b32.cont [10/16] %v1725, 128
    %1888 = vxpose.xlu0.b32.cont [11/16] %v1772, 128
    %1889 = vxpose.xlu0.b32.cont [12/16] %v1775, 128
    %1890 = vxpose.xlu0.b32.cont [13/16] %v1822, 128
    %1891 = vxpose.xlu0.b32.cont [14/16] %v1825, 128
    %1892 = vxpose.xlu0.b32.cont [15/16] %v1872, 128
    %1893 = vxpose.xlu0.b32.end [16/16] %v1875, 128
    %v1894 = vpop.trf.xlu0
    %v1895 = vpop.trf.xlu0
    %v1896 = vpop.trf.xlu0
    %v1897 = vpop.trf.xlu0
    %v1898 = vpop.trf.xlu0
    %v1899 = vpop.trf.xlu0
    %v1900 = vpop.trf.xlu0
    %v1901 = vpop.trf.xlu0
    %v1902 = vpop.trf.xlu0
    %v1903 = vpop.trf.xlu0
    %v1904 = vpop.trf.xlu0
    %v1905 = vpop.trf.xlu0
    %v1906 = vpop.trf.xlu0
    %v1907 = vpop.trf.xlu0
    %v1908 = vpop.trf.xlu0
    %v1909 = vpop.trf.xlu0
    %v1910 = vpack.c.bf16 %v1895, %v1894
    %v1911 = vpack.c.bf16 %v1897, %v1896
    %v1912 = vld [vmem:[#allocation8] sm:$0xf]
    %v1913 = vld [vmem:[#allocation8 + $0x4] sm:$0xf]
    %v1914 = vld [vmem:[#allocation8 + $0x8] sm:$0xf]
    %v1915 = vld [vmem:[#allocation8 + $0xc] sm:$0xf]
    %v1916 = vld [vmem:[#allocation8 + $0x10] sm:$0xf]
    %v1917 = vld [vmem:[#allocation8 + $0x14] sm:$0xf]
    %v1918 = vld [vmem:[#allocation8 + $0x18] sm:$0xf]
    %v1919 = vld [vmem:[#allocation8 + $0x1c] sm:$0xf]
    %v1920 = vld [vmem:[#allocation8 + $0x20] sm:$0xf]
    %v1921 = vld [vmem:[#allocation8 + $0x24] sm:$0xf]
    %v1922 = vld [vmem:[#allocation8 + $0x28] sm:$0xf]
    %v1923 = vld [vmem:[#allocation8 + $0x2c] sm:$0xf]
    %v1924 = vld [vmem:[#allocation8 + $0x30] sm:$0xf]
    %v1925 = vld [vmem:[#allocation8 + $0x34] sm:$0xf]
    %v1926 = vld [vmem:[#allocation8 + $0x38] sm:$0xf]
    %v1927 = vld [vmem:[#allocation8 + $0x3c] sm:$0xf]
    %v1928 = vld [vmem:[%s5] sm:$0x1]
    %v1930 = vlaneseq
    %v1931 = vshrl.u32 %v1930, 7
    %v1932 = vsub.s32 0, %v1931
    %v1933 = vrot.slane %v1928, %v1932
    %v1951 = vunpack.c.l.b16 %v1912
    %v1952 = vunpack.c.l.b16 %v1913
    %v1953 = vunpack.c.l.b16 %v1914
    %v1954 = vunpack.c.l.b16 %v1915
    %v1955 = vunpack.c.l.b16 %v1916
    %v1956 = vunpack.c.l.b16 %v1917
    %v1957 = vunpack.c.l.b16 %v1918
    %v1958 = vunpack.c.l.b16 %v1919
    %v1959 = vunpack.c.l.b16 %v1920
    %v1960 = vunpack.c.l.b16 %v1921
    %v1961 = vunpack.c.l.b16 %v1922
    %v1962 = vunpack.c.l.b16 %v1923
    %v1963 = vunpack.c.l.b16 %v1924
    %v1964 = vunpack.c.l.b16 %v1925
    %v1965 = vunpack.c.l.b16 %v1926
    %v1966 = vunpack.c.l.b16 %v1927
    %v1967 = vpack.c.b16 %v1952, %v1951
    %v1968 = vpack.c.b16 %v1954, %v1953
    %v1969 = vpack.c.b16 %v1956, %v1955
    %v1970 = vpack.c.b16 %v1958, %v1957
    %v1971 = vpack.c.b16 %v1960, %v1959
    %v1972 = vpack.c.b16 %v1962, %v1961
    %v1973 = vpack.c.b16 %v1964, %v1963
    %v1974 = vpack.c.b16 %v1966, %v1965
    %1983 = vmatprep.subr.bf16.mxu0 0
    %1984 = vmatpush1.bf16.msra.mxu0 %v1974
    %1985 = vmatprep.subr.bf16.mxu0 0
    %1986 = vmatpush1.bf16.msra.mxu0 %v1973
    %1987 = vmatprep.subr.bf16.mxu0 0
    %1988 = vmatpush1.bf16.msra.mxu0 %v1972
    %1989 = vmatprep.subr.bf16.mxu0 0
    %1990 = vmatpush1.bf16.msra.mxu0 %v1971
    %1991 = vmatprep.subr.bf16.mxu0 0
    %1992 = vmatpush1.bf16.msra.mxu0 %v1970
    %1993 = vmatprep.subr.bf16.mxu0 0
    %1994 = vmatpush1.bf16.msra.mxu0 %v1969
    %1995 = vmatprep.subr.bf16.mxu0 0
    %1996 = vmatpush1.bf16.msra.mxu0 %v1968
    %1997 = vmatprep.subr.bf16.mxu0 0
    %1998 = vmatpush1.bf16.msra.mxu0 %v1967
    %1999 = vmatprep.subr.bf16.mxu0 0
    %2000 = vmatpush2.bf16.msra.mxu0 0
    %2001 = vmatprep.subr.bf16.mxu0 0
    %2002 = vmatpush2.bf16.msra.mxu0 0
    %2003 = vmatprep.subr.bf16.mxu0 0
    %2004 = vmatpush2.bf16.msra.mxu0 0
    %2005 = vmatprep.subr.bf16.mxu0 0
    %2006 = vmatpush2.bf16.msra.mxu0 0
    %2007 = vmatprep.subr.bf16.mxu0 0
    %2008 = vmatpush2.bf16.msra.mxu0 0
    %2009 = vmatprep.subr.bf16.mxu0 0
    %2010 = vmatpush2.bf16.msra.mxu0 0
    %2011 = vmatprep.subr.bf16.mxu0 0
    %2012 = vmatpush2.bf16.msra.mxu0 0
    %2013 = vmatprep.subr.bf16.mxu0 0
    %2014 = vmatpush2.bf16.msra.mxu0 0
    %2015 = vmatprep.mubr.bf16.mxu0 0
    %2016 = vmatmul.mubr.bf16.gmra.mxu0 %v1910
    %v2017 = vpop.f32.mrf.mxu0
    %v2018 = vadd.f32 %v1933, %v2017
    %v2019 = vpop.f32.mrf.mxu0
    %v2020 = vpop.f32.mrf.mxu0
    %v2021 = vadd.f32 %v1933, %v2020
    %v2022 = vpop.f32.mrf.mxu0
    %2023 = vmatprep.mubr.bf16.mxu0 0
    %2024 = vmatmul.mubr.bf16.gmra.mxu0 %v1911
    %v2025 = vpop.f32.mrf.mxu0
    %v2026 = vadd.f32 %v1933, %v2025
    %v2027 = vpop.f32.mrf.mxu0
    %v2028 = vpop.f32.mrf.mxu0
    %v2029 = vadd.f32 %v1933, %v2028
    %v2030 = vpop.f32.mrf.mxu0
    %2031 = vdwg.mxu0
    %v2032 = vadd.f32 %v131, %v2018
    %v2033 = vadd.f32 %v132, %v2021
    %v2034 = vadd.f32 %v133, %v2026
    %v2035 = vadd.f32 %v134, %v2029
    %v2036 = vld [vmem:[%s6] sm:$0x1]
    %v2037 = vld [vmem:[%s7] sm:$0x1]
    %2038 = vadd.xlane.f32.xlu0 %v2032
    %v2039 = vpop.xlane.xlu0 %2038
    %2040 = vadd.xlane.f32.xlu0 %v2033
    %v2041 = vpop.xlane.xlu0 %2040
    %2042 = vadd.xlane.f32.xlu0 %v2034
    %v2043 = vpop.xlane.xlu0 %2042
    %2044 = vadd.xlane.f32.xlu0 %v2035
    %v2045 = vpop.xlane.xlu0 %2044
    %v2046 = vrcp.pop 128.0
    %v2047 = vmul.f32 %v2039, %v2046
    %v2048 = vmul.f32 %v2041, %v2046
    %v2049 = vmul.f32 %v2043, %v2046
    %v2050 = vmul.f32 %v2045, %v2046
    %v2051 = vsub.f32 %v2032, %v2047
    %v2052 = vsub.f32 %v2033, %v2048
    %v2053 = vsub.f32 %v2034, %v2049
    %v2054 = vsub.f32 %v2035, %v2050
    %v2055 = vmul.f32 %v2051, %v2051
    %v2056 = vmul.f32 %v2052, %v2052
    %v2057 = vmul.f32 %v2053, %v2053
    %v2058 = vmul.f32 %v2054, %v2054
    %2059 = vadd.xlane.f32.xlu0 %v2055
    %v2060 = vpop.xlane.xlu0 %2059
    %2061 = vadd.xlane.f32.xlu0 %v2056
    %v2062 = vpop.xlane.xlu0 %2061
    %2063 = vadd.xlane.f32.xlu0 %v2057
    %v2064 = vpop.xlane.xlu0 %2063
    %2065 = vadd.xlane.f32.xlu0 %v2058
    %v2066 = vpop.xlane.xlu0 %2065
    %v2067 = vmul.f32 %v2060, %v2046
    %v2068 = vmul.f32 %v2062, %v2046
    %v2069 = vmul.f32 %v2064, %v2046
    %v2070 = vmul.f32 %v2066, %v2046
    %v2071 = vadd.f32 %v2067, 1e-05
    %v2072 = vadd.f32 %v2068, 1e-05
    %v2073 = vadd.f32 %v2069, 1e-05
    %v2074 = vadd.f32 %v2070, 1e-05
    %v2075 = vrsqrt.pop %v2071
    %v2076 = vrsqrt.pop %v2072
    %v2077 = vrsqrt.pop %v2073
    %v2078 = vrsqrt.pop %v2074
    %v2079 = vmul.f32 %v2051, %v2075
    %v2080 = vmul.f32 %v2052, %v2076
    %v2081 = vmul.f32 %v2053, %v2077
    %v2082 = vmul.f32 %v2054, %v2078
    %v2084 = vlaneseq
    %v2085 = vshrl.u32 %v2084, 7
    %v2086 = vsub.s32 0, %v2085
    %v2087 = vrot.slane %v2036, %v2086
    %v2089 = vmul.f32 %v2079, %v2087
    %v2090 = vmul.f32 %v2080, %v2087
    %v2091 = vmul.f32 %v2081, %v2087
    %v2092 = vmul.f32 %v2082, %v2087
    %v2094 = vlaneseq
    %v2095 = vshrl.u32 %v2094, 7
    %v2096 = vsub.s32 0, %v2095
    %v2097 = vrot.slane %v2037, %v2096
    %v2099 = vadd.f32 %v2089, %v2097
    %v2100 = vadd.f32 %v2090, %v2097
    %v2101 = vadd.f32 %v2091, %v2097
    %v2102 = vadd.f32 %v2092, %v2097
    %v2103 = vpack.c.bf16 %v2100, %v2099
    %v2104 = vpack.c.bf16 %v2102, %v2101
    %v2105 = vld [vmem:[#allocation10] sm:$0xff]
    %v2106 = vld [vmem:[#allocation10 + $0x8] sm:$0xff]
    %v2107 = vld [vmem:[#allocation10 + $0x10] sm:$0xff]
    %v2108 = vld [vmem:[#allocation10 + $0x18] sm:$0xff]
    %v2109 = vld [vmem:[#allocation10 + $0x20] sm:$0xff]
    %v2110 = vld [vmem:[#allocation10 + $0x28] sm:$0xff]
    %v2111 = vld [vmem:[#allocation10 + $0x30] sm:$0xff]
    %v2112 = vld [vmem:[#allocation10 + $0x38] sm:$0xff]
    %v2113 = vld [vmem:[#allocation10 + $0x40] sm:$0xff]
    %v2114 = vld [vmem:[#allocation10 + $0x48] sm:$0xff]
    %v2115 = vld [vmem:[#allocation10 + $0x50] sm:$0xff]
    %v2116 = vld [vmem:[#allocation10 + $0x58] sm:$0xff]
    %v2117 = vld [vmem:[#allocation10 + $0x60] sm:$0xff]
    %v2118 = vld [vmem:[#allocation10 + $0x68] sm:$0xff]
    %v2119 = vld [vmem:[#allocation10 + $0x70] sm:$0xff]
    %v2120 = vld [vmem:[#allocation10 + $0x78] sm:$0xff]
    %v2121 = vld [vmem:[%s9] sm:$0x3]
    %v2123 = vlaneseq
    %v2124 = vshrl.u32 %v2123, 7
    %v2125 = vsub.s32 0, %v2124
    %v2126 = vrot.slane %v2121, %v2125
    %v2127 = vlaneseq
    %v2128 = vshrl.u32 %v2127, 7
    %v2129 = vsub.s32 1, %v2128
    %v2130 = vrot.slane %v2121, %v2129
    %v2149 = vunpack.c.l.b16 %v2105
    %v2150 = vunpack.c.h.b16 %v2105
    %v2151 = vunpack.c.l.b16 %v2106
    %v2152 = vunpack.c.h.b16 %v2106
    %v2153 = vunpack.c.l.b16 %v2107
    %v2154 = vunpack.c.h.b16 %v2107
    %v2155 = vunpack.c.l.b16 %v2108
    %v2156 = vunpack.c.h.b16 %v2108
    %v2157 = vunpack.c.l.b16 %v2109
    %v2158 = vunpack.c.h.b16 %v2109
    %v2159 = vunpack.c.l.b16 %v2110
    %v2160 = vunpack.c.h.b16 %v2110
    %v2161 = vunpack.c.l.b16 %v2111
    %v2162 = vunpack.c.h.b16 %v2111
    %v2163 = vunpack.c.l.b16 %v2112
    %v2164 = vunpack.c.h.b16 %v2112
    %v2165 = vunpack.c.l.b16 %v2113
    %v2166 = vunpack.c.h.b16 %v2113
    %v2167 = vunpack.c.l.b16 %v2114
    %v2168 = vunpack.c.h.b16 %v2114
    %v2169 = vunpack.c.l.b16 %v2115
    %v2170 = vunpack.c.h.b16 %v2115
    %v2171 = vunpack.c.l.b16 %v2116
    %v2172 = vunpack.c.h.b16 %v2116
    %v2173 = vunpack.c.l.b16 %v2117
    %v2174 = vunpack.c.h.b16 %v2117
    %v2175 = vunpack.c.l.b16 %v2118
    %v2176 = vunpack.c.h.b16 %v2118
    %v2177 = vunpack.c.l.b16 %v2119
    %v2178 = vunpack.c.h.b16 %v2119
    %v2179 = vunpack.c.l.b16 %v2120
    %v2180 = vunpack.c.h.b16 %v2120
    %v2181 = vpack.c.b16 %v2151, %v2149
    %v2182 = vpack.c.b16 %v2152, %v2150
    %v2183 = vpack.c.b16 %v2155, %v2153
    %v2184 = vpack.c.b16 %v2156, %v2154
    %v2185 = vpack.c.b16 %v2159, %v2157
    %v2186 = vpack.c.b16 %v2160, %v2158
    %v2187 = vpack.c.b16 %v2163, %v2161
    %v2188 = vpack.c.b16 %v2164, %v2162
    %v2189 = vpack.c.b16 %v2167, %v2165
    %v2190 = vpack.c.b16 %v2168, %v2166
    %v2191 = vpack.c.b16 %v2171, %v2169
    %v2192 = vpack.c.b16 %v2172, %v2170
    %v2193 = vpack.c.b16 %v2175, %v2173
    %v2194 = vpack.c.b16 %v2176, %v2174
    %v2195 = vpack.c.b16 %v2179, %v2177
    %v2196 = vpack.c.b16 %v2180, %v2178
    %2213 = vmatprep.subr.bf16.mxu0 %v2196
    %2214 = vmatpush1.bf16.msra.mxu0 %v2195
    %2215 = vmatprep.subr.bf16.mxu0 %v2194
    %2216 = vmatpush1.bf16.msra.mxu0 %v2193
    %2217 = vmatprep.subr.bf16.mxu0 %v2192
    %2218 = vmatpush1.bf16.msra.mxu0 %v2191
    %2219 = vmatprep.subr.bf16.mxu0 %v2190
    %2220 = vmatpush1.bf16.msra.mxu0 %v2189
    %2221 = vmatprep.subr.bf16.mxu0 %v2188
    %2222 = vmatpush1.bf16.msra.mxu0 %v2187
    %2223 = vmatprep.subr.bf16.mxu0 %v2186
    %2224 = vmatpush1.bf16.msra.mxu0 %v2185
    %2225 = vmatprep.subr.bf16.mxu0 %v2184
    %2226 = vmatpush1.bf16.msra.mxu0 %v2183
    %2227 = vmatprep.subr.bf16.mxu0 %v2182
    %2228 = vmatpush1.bf16.msra.mxu0 %v2181
    %2229 = vmatprep.subr.bf16.mxu0 0
    %2230 = vmatpush2.bf16.msra.mxu0 0
    %2231 = vmatprep.subr.bf16.mxu0 0
    %2232 = vmatpush2.bf16.msra.mxu0 0
    %2233 = vmatprep.subr.bf16.mxu0 0
    %2234 = vmatpush2.bf16.msra.mxu0 0
    %2235 = vmatprep.subr.bf16.mxu0 0
    %2236 = vmatpush2.bf16.msra.mxu0 0
    %2237 = vmatprep.subr.bf16.mxu0 0
    %2238 = vmatpush2.bf16.msra.mxu0 0
    %2239 = vmatprep.subr.bf16.mxu0 0
    %2240 = vmatpush2.bf16.msra.mxu0 0
    %2241 = vmatprep.subr.bf16.mxu0 0
    %2242 = vmatpush2.bf16.msra.mxu0 0
    %2243 = vmatprep.subr.bf16.mxu0 0
    %2244 = vmatpush2.bf16.msra.mxu0 0
    %2245 = vmatprep.mubr.bf16.mxu0 0
    %2246 = vmatmul.mubr.bf16.gmra.mxu0 %v2103
    %v2247 = vpop.f32.mrf.mxu0
    %v2248 = vadd.f32 %v2126, %v2247
    %v2249 = vpop.f32.mrf.mxu0
    %v2250 = vadd.f32 %v2130, %v2249
    %v2251 = vpop.f32.mrf.mxu0
    %v2252 = vadd.f32 %v2126, %v2251
    %v2253 = vpop.f32.mrf.mxu0
    %v2254 = vadd.f32 %v2130, %v2253
    %2255 = vmatprep.mubr.bf16.mxu0 0
    %2256 = vmatmul.mubr.bf16.gmra.mxu0 %v2104
    %v2257 = vpop.f32.mrf.mxu0
    %v2258 = vadd.f32 %v2126, %v2257
    %v2259 = vpop.f32.mrf.mxu0
    %v2260 = vadd.f32 %v2130, %v2259
    %v2261 = vpop.f32.mrf.mxu0
    %v2262 = vadd.f32 %v2126, %v2261
    %v2263 = vpop.f32.mrf.mxu0
    %v2264 = vadd.f32 %v2130, %v2263
    %2265 = vdwg.mxu0
    %v2266 = vmul.f32 %v2248, 0.5
    %v2267 = vmul.f32 %v2250, 0.5
    %v2268 = vmul.f32 %v2252, 0.5
    %v2269 = vmul.f32 %v2254, 0.5
    %v2270 = vmul.f32 %v2258, 0.5
    %v2271 = vmul.f32 %v2260, 0.5
    %v2272 = vmul.f32 %v2262, 0.5
    %v2273 = vmul.f32 %v2264, 0.5
    %v2274 = vrcp.pop 1.4142135
    %v2275 = vmul.f32 %v2248, %v2274
    %v2276 = vmul.f32 %v2250, %v2274
    %v2277 = vmul.f32 %v2252, %v2274
    %v2278 = vmul.f32 %v2254, %v2274
    %v2279 = vmul.f32 %v2258, %v2274
    %v2280 = vmul.f32 %v2260, %v2274
    %v2281 = vmul.f32 %v2262, %v2274
    %v2282 = vmul.f32 %v2264, %v2274
    %v2283 = verf.f32.pop %v2275
    %v2284 = verf.f32.pop %v2276
    %v2285 = verf.f32.pop %v2277
    %v2286 = verf.f32.pop %v2278
    %v2287 = verf.f32.pop %v2279
    %v2288 = verf.f32.pop %v2280
    %v2289 = verf.f32.pop %v2281
    %v2290 = verf.f32.pop %v2282
    %v2291 = vadd.f32 %v2283, 1.0
    %v2292 = vadd.f32 %v2284, 1.0
    %v2293 = vadd.f32 %v2285, 1.0
    %v2294 = vadd.f32 %v2286, 1.0
    %v2295 = vadd.f32 %v2287, 1.0
    %v2296 = vadd.f32 %v2288, 1.0
    %v2297 = vadd.f32 %v2289, 1.0
    %v2298 = vadd.f32 %v2290, 1.0
    %v2299 = vmul.f32 %v2266, %v2291
    %v2300 = vmul.f32 %v2267, %v2292
    %v2301 = vmul.f32 %v2268, %v2293
    %v2302 = vmul.f32 %v2269, %v2294
    %v2303 = vmul.f32 %v2270, %v2295
    %v2304 = vmul.f32 %v2271, %v2296
    %v2305 = vmul.f32 %v2272, %v2297
    %v2306 = vmul.f32 %v2273, %v2298
    %v2307 = vpack.c.bf16 %v2301, %v2299
    %v2308 = vpack.c.bf16 %v2302, %v2300
    %v2309 = vpack.c.bf16 %v2305, %v2303
    %v2310 = vpack.c.bf16 %v2306, %v2304
    %v2311 = vld [vmem:[#allocation11] sm:$0xf]
    %v2312 = vld [vmem:[#allocation11 + $0x4] sm:$0xf]
    %v2313 = vld [vmem:[#allocation11 + $0x8] sm:$0xf]
    %v2314 = vld [vmem:[#allocation11 + $0xc] sm:$0xf]
    %v2315 = vld [vmem:[#allocation11 + $0x10] sm:$0xf]
    %v2316 = vld [vmem:[#allocation11 + $0x14] sm:$0xf]
    %v2317 = vld [vmem:[#allocation11 + $0x18] sm:$0xf]
    %v2318 = vld [vmem:[#allocation11 + $0x1c] sm:$0xf]
    %v2319 = vld [vmem:[#allocation11 + $0x20] sm:$0xf]
    %v2320 = vld [vmem:[#allocation11 + $0x24] sm:$0xf]
    %v2321 = vld [vmem:[#allocation11 + $0x28] sm:$0xf]
    %v2322 = vld [vmem:[#allocation11 + $0x2c] sm:$0xf]
    %v2323 = vld [vmem:[#allocation11 + $0x30] sm:$0xf]
    %v2324 = vld [vmem:[#allocation11 + $0x34] sm:$0xf]
    %v2325 = vld [vmem:[#allocation11 + $0x38] sm:$0xf]
    %v2326 = vld [vmem:[#allocation11 + $0x3c] sm:$0xf]
    %v2327 = vld [vmem:[#allocation11 + $0x40] sm:$0xf]
    %v2328 = vld [vmem:[#allocation11 + $0x44] sm:$0xf]
    %v2329 = vld [vmem:[#allocation11 + $0x48] sm:$0xf]
    %v2330 = vld [vmem:[#allocation11 + $0x4c] sm:$0xf]
    %v2331 = vld [vmem:[#allocation11 + $0x50] sm:$0xf]
    %v2332 = vld [vmem:[#allocation11 + $0x54] sm:$0xf]
    %v2333 = vld [vmem:[#allocation11 + $0x58] sm:$0xf]
    %v2334 = vld [vmem:[#allocation11 + $0x5c] sm:$0xf]
    %v2335 = vld [vmem:[#allocation11 + $0x60] sm:$0xf]
    %v2336 = vld [vmem:[#allocation11 + $0x64] sm:$0xf]
    %v2337 = vld [vmem:[#allocation11 + $0x68] sm:$0xf]
    %v2338 = vld [vmem:[#allocation11 + $0x6c] sm:$0xf]
    %v2339 = vld [vmem:[#allocation11 + $0x70] sm:$0xf]
    %v2340 = vld [vmem:[#allocation11 + $0x74] sm:$0xf]
    %v2341 = vld [vmem:[#allocation11 + $0x78] sm:$0xf]
    %v2342 = vld [vmem:[#allocation11 + $0x7c] sm:$0xf]
    %v2343 = vld [vmem:[%s11] sm:$0x1]
    %v2345 = vlaneseq
    %v2346 = vshrl.u32 %v2345, 7
    %v2347 = vsub.s32 0, %v2346
    %v2348 = vrot.slane %v2343, %v2347
    %v2382 = vunpack.c.l.b16 %v2311
    %v2383 = vunpack.c.l.b16 %v2312
    %v2384 = vunpack.c.l.b16 %v2313
    %v2385 = vunpack.c.l.b16 %v2314
    %v2386 = vunpack.c.l.b16 %v2315
    %v2387 = vunpack.c.l.b16 %v2316
    %v2388 = vunpack.c.l.b16 %v2317
    %v2389 = vunpack.c.l.b16 %v2318
    %v2390 = vunpack.c.l.b16 %v2319
    %v2391 = vunpack.c.l.b16 %v2320
    %v2392 = vunpack.c.l.b16 %v2321
    %v2393 = vunpack.c.l.b16 %v2322
    %v2394 = vunpack.c.l.b16 %v2323
    %v2395 = vunpack.c.l.b16 %v2324
    %v2396 = vunpack.c.l.b16 %v2325
    %v2397 = vunpack.c.l.b16 %v2326
    %v2398 = vunpack.c.l.b16 %v2327
    %v2399 = vunpack.c.l.b16 %v2328
    %v2400 = vunpack.c.l.b16 %v2329
    %v2401 = vunpack.c.l.b16 %v2330
    %v2402 = vunpack.c.l.b16 %v2331
    %v2403 = vunpack.c.l.b16 %v2332
    %v2404 = vunpack.c.l.b16 %v2333
    %v2405 = vunpack.c.l.b16 %v2334
    %v2406 = vunpack.c.l.b16 %v2335
    %v2407 = vunpack.c.l.b16 %v2336
    %v2408 = vunpack.c.l.b16 %v2337
    %v2409 = vunpack.c.l.b16 %v2338
    %v2410 = vunpack.c.l.b16 %v2339
    %v2411 = vunpack.c.l.b16 %v2340
    %v2412 = vunpack.c.l.b16 %v2341
    %v2413 = vunpack.c.l.b16 %v2342
    %v2414 = vpack.c.b16 %v2383, %v2382
    %v2415 = vpack.c.b16 %v2385, %v2384
    %v2416 = vpack.c.b16 %v2387, %v2386
    %v2417 = vpack.c.b16 %v2389, %v2388
    %v2418 = vpack.c.b16 %v2391, %v2390
    %v2419 = vpack.c.b16 %v2393, %v2392
    %v2420 = vpack.c.b16 %v2395, %v2394
    %v2421 = vpack.c.b16 %v2397, %v2396
    %v2422 = vpack.c.b16 %v2399, %v2398
    %v2423 = vpack.c.b16 %v2401, %v2400
    %v2424 = vpack.c.b16 %v2403, %v2402
    %v2425 = vpack.c.b16 %v2405, %v2404
    %v2426 = vpack.c.b16 %v2407, %v2406
    %v2427 = vpack.c.b16 %v2409, %v2408
    %v2428 = vpack.c.b16 %v2411, %v2410
    %v2429 = vpack.c.b16 %v2413, %v2412
    %2446 = vmatprep.subr.bf16.mxu0 0
    %2447 = vmatpush1.bf16.msra.mxu0 %v2421
    %2448 = vmatprep.subr.bf16.mxu0 0
    %2449 = vmatpush1.bf16.msra.mxu0 %v2420
    %2450 = vmatprep.subr.bf16.mxu0 0
    %2451 = vmatpush1.bf16.msra.mxu0 %v2419
    %2452 = vmatprep.subr.bf16.mxu0 0
    %2453 = vmatpush1.bf16.msra.mxu0 %v2418
    %2454 = vmatprep.subr.bf16.mxu0 0
    %2455 = vmatpush1.bf16.msra.mxu0 %v2417
    %2456 = vmatprep.subr.bf16.mxu0 0
    %2457 = vmatpush1.bf16.msra.mxu0 %v2416
    %2458 = vmatprep.subr.bf16.mxu0 0
    %2459 = vmatpush1.bf16.msra.mxu0 %v2415
    %2460 = vmatprep.subr.bf16.mxu0 0
    %2461 = vmatpush1.bf16.msra.mxu0 %v2414
    %2462 = vmatprep.subr.bf16.mxu0 0
    %2463 = vmatpush2.bf16.msra.mxu0 %v2429
    %2464 = vmatprep.subr.bf16.mxu0 0
    %2465 = vmatpush2.bf16.msra.mxu0 %v2428
    %2466 = vmatprep.subr.bf16.mxu0 0
    %2467 = vmatpush2.bf16.msra.mxu0 %v2427
    %2468 = vmatprep.subr.bf16.mxu0 0
    %2469 = vmatpush2.bf16.msra.mxu0 %v2426
    %2470 = vmatprep.subr.bf16.mxu0 0
    %2471 = vmatpush2.bf16.msra.mxu0 %v2425
    %2472 = vmatprep.subr.bf16.mxu0 0
    %2473 = vmatpush2.bf16.msra.mxu0 %v2424
    %2474 = vmatprep.subr.bf16.mxu0 0
    %2475 = vmatpush2.bf16.msra.mxu0 %v2423
    %2476 = vmatprep.subr.bf16.mxu0 0
    %2477 = vmatpush2.bf16.msra.mxu0 %v2422
    %2478 = vmatprep.mubr.bf16.mxu0 %v2308
    %2479 = vmatmul.mubr.bf16.gmra.mxu0 %v2307
    %v2480 = vpop.f32.mrf.mxu0
    %v2481 = vadd.f32 %v2348, %v2480
    %v2482 = vpop.f32.mrf.mxu0
    %v2483 = vpop.f32.mrf.mxu0
    %v2484 = vadd.f32 %v2348, %v2483
    %v2485 = vpop.f32.mrf.mxu0
    %2486 = vmatprep.mubr.bf16.mxu0 %v2310
    %2487 = vmatmul.mubr.bf16.gmra.mxu0 %v2309
    %v2488 = vpop.f32.mrf.mxu0
    %v2489 = vadd.f32 %v2348, %v2488
    %v2490 = vpop.f32.mrf.mxu0
    %v2491 = vpop.f32.mrf.mxu0
    %v2492 = vadd.f32 %v2348, %v2491
    %v2493 = vpop.f32.mrf.mxu0
    %2494 = vdwg.mxu0
    %v2495 = vadd.f32 %v2099, %v2481
    %v2496 = vadd.f32 %v2100, %v2484
    %v2497 = vadd.f32 %v2101, %v2489
    %v2498 = vadd.f32 %v2102, %v2492
    %v2499 = vld [vmem:[%s12] sm:$0x1]
    %v2500 = vld [vmem:[%s13] sm:$0x1]
    %2501 = vadd.xlane.f32.xlu0 %v2495
    %v2502 = vpop.xlane.xlu0 %2501
    %2503 = vadd.xlane.f32.xlu0 %v2496
    %v2504 = vpop.xlane.xlu0 %2503
    %2505 = vadd.xlane.f32.xlu0 %v2497
    %v2506 = vpop.xlane.xlu0 %2505
    %2507 = vadd.xlane.f32.xlu0 %v2498
    %v2508 = vpop.xlane.xlu0 %2507
    %v2509 = vmul.f32 %v2502, %v2046
    %v2510 = vmul.f32 %v2504, %v2046
    %v2511 = vmul.f32 %v2506, %v2046
    %v2512 = vmul.f32 %v2508, %v2046
    %v2513 = vsub.f32 %v2495, %v2509
    %v2514 = vsub.f32 %v2496, %v2510
    %v2515 = vsub.f32 %v2497, %v2511
    %v2516 = vsub.f32 %v2498, %v2512
    %v2517 = vmul.f32 %v2513, %v2513
    %v2518 = vmul.f32 %v2514, %v2514
    %v2519 = vmul.f32 %v2515, %v2515
    %v2520 = vmul.f32 %v2516, %v2516
    %2521 = vadd.xlane.f32.xlu0 %v2517
    %v2522 = vpop.xlane.xlu0 %2521
    %2523 = vadd.xlane.f32.xlu0 %v2518
    %v2524 = vpop.xlane.xlu0 %2523
    %2525 = vadd.xlane.f32.xlu0 %v2519
    %v2526 = vpop.xlane.xlu0 %2525
    %2527 = vadd.xlane.f32.xlu0 %v2520
    %v2528 = vpop.xlane.xlu0 %2527
    %v2529 = vmul.f32 %v2522, %v2046
    %v2530 = vmul.f32 %v2524, %v2046
    %v2531 = vmul.f32 %v2526, %v2046
    %v2532 = vmul.f32 %v2528, %v2046
    %v2533 = vadd.f32 %v2529, 1e-05
    %v2534 = vadd.f32 %v2530, 1e-05
    %v2535 = vadd.f32 %v2531, 1e-05
    %v2536 = vadd.f32 %v2532, 1e-05
    %v2537 = vrsqrt.pop %v2533
    %v2538 = vrsqrt.pop %v2534
    %v2539 = vrsqrt.pop %v2535
    %v2540 = vrsqrt.pop %v2536
    %v2541 = vmul.f32 %v2513, %v2537
    %v2542 = vmul.f32 %v2514, %v2538
    %v2543 = vmul.f32 %v2515, %v2539
    %v2544 = vmul.f32 %v2516, %v2540
    %v2546 = vlaneseq
    %v2547 = vshrl.u32 %v2546, 7
    %v2548 = vsub.s32 0, %v2547
    %v2549 = vrot.slane %v2499, %v2548
    %v2551 = vmul.f32 %v2541, %v2549
    %v2552 = vmul.f32 %v2542, %v2549
    %v2553 = vmul.f32 %v2543, %v2549
    %v2554 = vmul.f32 %v2544, %v2549
    %v2556 = vlaneseq
    %v2557 = vshrl.u32 %v2556, 7
    %v2558 = vsub.s32 0, %v2557
    %v2559 = vrot.slane %v2500, %v2558
    %v2561 = vadd.f32 %v2551, %v2559
    %v2562 = vadd.f32 %v2552, %v2559
    %v2563 = vadd.f32 %v2553, %v2559
    %v2564 = vadd.f32 %v2554, %v2559
    %2565 = vst [vmem:[#allocation13] sm:$0xff] %v2561
    %2566 = vst [vmem:[#allocation13 + $0x8] sm:$0xff] %v2562
    %2567 = vst [vmem:[#allocation13 + $0x10] sm:$0xff] %v2563
    %2568 = vst [vmem:[#allocation13 + $0x18] sm:$0xff] %v2564
    // Predicated region
    $region82: #{tpu_custom_call.1} parent=1 // pred_check
      _
    $region83: #{tpu_custom_call.1} parent=1 // pred_check_branch
      %2570 = sbr.rel (0) target = $region85
    $region84: #{tpu_custom_call.1} parent=1 // pred_region
      %s2572 = ssub.s32 512, 512
      %2573 = vsyncadd [#allocation4], %s2572
      %s2574 = sshll.u32 [#allocation13], 4
      %s2575 = int_to_ptr.vmem [resolvable:$true] %s2574
      %2580 = dma.vmem_to_hbm [thread:$0]  %s2575, 512, %s14, [#allocation4], 128, 128, 8
    $region85: #{tpu_custom_call.1} parent=1 // pred_fallthru
      _
    // Predicated region
    $region86: #{tpu_custom_call.1} parent=1 // pred_check
      _
    $region87: #{tpu_custom_call.1} parent=1 // pred_check_branch
      %2582 = sbr.rel (0) target = $region89
    $region88: #{tpu_custom_call.1} parent=1 // pred_region
      %2583 = dma.done [#allocation4], 512
    $region89: #{tpu_custom_call.1} parent=1 // pred_fallthru
      _
    %2584 = vsyncpa [#allocation3], 1
    %2585 = vsyncpa [#allocation6], 1
    %2586 = vsyncpa [#allocation9], 1
    %2587 = vsyncpa [#allocation12], 1
    %2588 = vsyncpa [#allocation4], 1

</llo_original>
